<compile_context>
chip_gen: v7x
topology: tpu7x:2x2x1
jax: 0.10.0
libtpu: 0.0.40
codegen_flags: <defaults>
</compile_context>

<pallas_src>
import functools  # noqa: F401  (kept for easy kernel parametrization)

import jax
import jax.numpy as jnp
from jax.experimental import pallas as pl
from jax.experimental.pallas import tpu as pltpu


def _round_up(x, m):
    return (x + m - 1) // m * m


# ----------------------------------------------------------------------------
# Pallas kernel: fused bidirectional GRU (input projection + recurrence),
# time-chunked grid with the hidden state carried in VMEM scratch.
# ----------------------------------------------------------------------------
def _bigru_chunk_kernel(xx_ref, wih_ref, bi_ref, whh_ref, bn_ref,
                        out_ref, h_ref, gi_ref):
    """One time-chunk of the fused bidirectional GRU.

    xx_ref : (chunk*Bp, 2D)  rows = (time within chunk, batch) flattened;
             features = [x_t | x_{T-1-t}] (fwd / time-reversed input).
    wih_ref: (2D, 3*Hp)      packed input->hidden weights; gate groups [r|z|n],
             each group laid out as [fwd H | bwd H | zero pad].
    bi_ref : (1, 3*Hp)       b_ih (all gates) + b_hh (r,z gates), packed.
    whh_ref: (Hp, 3*Hp)      block-diagonal hidden->hidden weights.
    bn_ref : (1, Hp)         n-gate hidden bias (multiplied by r, kept apart).
    out_ref: (chunk*Bp, Hp)  hidden state per step; cols [0,H) forward hidden
             at time t, cols [H,2H) backward hidden at reversed step t.
    h_ref  : (Bp, Hp)        persistent hidden-state carry across grid steps.
    gi_ref : (chunk*Bp, 3*Hp) per-chunk input projections (VMEM scratch).
    """
    Bp, Hp = h_ref.shape
    chunk = out_ref.shape[0] // Bp

    @pl.when(pl.program_id(0) == 0)
    def _():
        h_ref[...] = jnp.zeros_like(h_ref)

    # Hoisted input projection for the whole chunk: one MXU matmul (parallel
    # work), then the serial loop only does the h_{t-1} @ W_hh part.
    gi_ref[...] = (
        jnp.dot(xx_ref[...], wih_ref[...], preferred_element_type=jnp.float32)
        + bi_ref[...])

    whh = whh_ref[...]        # resident for the whole loop
    bn = bn_ref[...]

    def step(i, h):
        row = pl.multiple_of(i * Bp, 8)            # 8-aligned sublane offset
        gi = gi_ref[pl.ds(row, Bp), :]             # (Bp, 3*Hp)
        gh = jnp.dot(h, whh, preferred_element_type=jnp.float32)  # one MXU op
        r = jax.nn.sigmoid(gi[:, 0:Hp] + gh[:, 0:Hp])
        z = jax.nn.sigmoid(gi[:, Hp:2 * Hp] + gh[:, Hp:2 * Hp])
        n = jnp.tanh(gi[:, 2 * Hp:3 * Hp] + r * (gh[:, 2 * Hp:3 * Hp] + bn))
        h_new = (1.0 - z) * n + z * h
        out_ref[pl.ds(row, Bp), :] = h_new         # full (8,128) tile store
        return h_new

    h_ref[...] = jax.lax.fori_loop(0, chunk, step, h_ref[...], unroll=True)


def bigru_pallas(x_tm, p, *, max_chunk=32):
    """Bidirectional single-layer GRU (PyTorch semantics).

    x_tm: (T, B, I) time-major  ->  (T, B, 2H)  [fwd | bwd] features.
    """
    T, B, D = x_tm.shape
    H = p["w_hh_f"].shape[0]
    Hp = _round_up(2 * H, 128)       # combined hidden width, lane aligned
    Bp = _round_up(B, 8)             # batch padded to full sublanes
    K = 2 * D                        # [fwd x | reversed x] feature width
    chunk = min(T, max_chunk)        # time-chunk per grid step (fully unrolled)
    Tp = _round_up(T, chunk)
    f32 = jnp.float32

    # ---- tiny wrapper-side data prep: forward + time-reversed features ----
    x_f = x_tm.astype(f32)
    x_b = jnp.flip(x_f, axis=0)
    xx = jnp.concatenate([x_f, x_b], axis=-1)                  # (T, B, 2D)
    xx = jnp.pad(xx, ((0, Tp - T), (0, Bp - B), (0, 0)))       # end-pad only
    xx2d = xx.reshape(Tp * Bp, K)

    # ---- packed parameters (one-time cost) ----
    wih = jnp.zeros((K, 3 * Hp), f32)      # rows [0,D): fwd x; [D,2D): bwd x
    bi = jnp.zeros((1, 3 * Hp), f32)
    whh = jnp.zeros((Hp, 3 * Hp), f32)     # block-diagonal per direction
    bn = jnp.zeros((1, Hp), f32)
    for g in range(3):                     # gate order: r, z, n
        c0 = g * Hp
        wih = wih.at[0:D, c0:c0 + H].set(p["w_ih_f"][:, g * H:(g + 1) * H])
        wih = wih.at[D:2 * D, c0 + H:c0 + 2 * H].set(
            p["w_ih_b"][:, g * H:(g + 1) * H])
        whh = whh.at[0:H, c0:c0 + H].set(p["w_hh_f"][:, g * H:(g + 1) * H])
        whh = whh.at[H:2 * H, c0 + H:c0 + 2 * H].set(
            p["w_hh_b"][:, g * H:(g + 1) * H])
        bias_f = p["b_ih_f"][:, g * H:(g + 1) * H]
        bias_b = p["b_ih_b"][:, g * H:(g + 1) * H]
        if g < 2:  # r, z gates: b_hh is a plain add -> fold it in here
            bias_f = bias_f + p["b_hh_f"][:, g * H:(g + 1) * H]
            bias_b = bias_b + p["b_hh_b"][:, g * H:(g + 1) * H]
        bi = bi.at[:, c0:c0 + H].set(bias_f)
        bi = bi.at[:, c0 + H:c0 + 2 * H].set(bias_b)
    bn = bn.at[:, 0:H].set(p["b_hh_f"][:, 2 * H:3 * H])
    bn = bn.at[:, H:2 * H].set(p["b_hh_b"][:, 2 * H:3 * H])

    rows = chunk * Bp
    out2d = pl.pallas_call(
        _bigru_chunk_kernel,
        out_shape=jax.ShapeDtypeStruct((Tp * Bp, Hp), f32),
        grid_spec=pltpu.PrefetchScalarGridSpec(
            num_scalar_prefetch=0,
            grid=(Tp // chunk,),
            in_specs=[
                pl.BlockSpec((rows, K), lambda c: (c, 0)),       # xx chunk
                pl.BlockSpec((K, 3 * Hp), lambda c: (0, 0)),     # W_ih packed
                pl.BlockSpec((1, 3 * Hp), lambda c: (0, 0)),     # bias packed
                pl.BlockSpec((Hp, 3 * Hp), lambda c: (0, 0)),    # W_hh packed
                pl.BlockSpec((1, Hp), lambda c: (0, 0)),         # b_hh (n)
            ],
            out_specs=pl.BlockSpec((rows, Hp), lambda c: (c, 0)),
            scratch_shapes=[
                pltpu.VMEM((Bp, Hp), f32),           # hidden-state carry
                pltpu.VMEM((rows, 3 * Hp), f32),     # per-chunk projections
            ],
        ),
        compiler_params=pltpu.CompilerParams(
            dimension_semantics=("arbitrary",)),     # serial carry across chunks
    )(xx2d, wih, bi, whh, bn)

    out = out2d.reshape(Tp, Bp, Hp)
    out_f = out[:T, :B, 0:H]                         # forward hidden at time t
    out_b = jnp.flip(out[:T, :B, H:2 * H], axis=0)   # backward, original order
    return jnp.concatenate([out_f, out_b], axis=-1)


# ----------------------------------------------------------------------------
# Pure-JAX (lax.scan) bidirectional GRU — reference, and the implementation of
# the tiny "long" GRU stage (seq=2, batch=1, H=16 is pure launch overhead as a
# pallas_call).
# ----------------------------------------------------------------------------
def _gru_direction_scan(x, w_ih, w_hh, b_ih, b_hh):
    T, B, _ = x.shape
    H = w_hh.shape[0]

    def step(h, x_t):
        gi = x_t @ w_ih + b_ih
        gh = h @ w_hh + b_hh
        i_r, i_z, i_n = jnp.split(gi, 3, axis=-1)
        h_r, h_z, h_n = jnp.split(gh, 3, axis=-1)
        r = jax.nn.sigmoid(i_r + h_r)
        z = jax.nn.sigmoid(i_z + h_z)
        n = jnp.tanh(i_n + r * h_n)
        h_new = (1.0 - z) * n + z * h
        return h_new, h_new

    _, outs = jax.lax.scan(step, jnp.zeros((B, H), jnp.float32), x)
    return outs


def bigru_scan(x, p):
    out_f = _gru_direction_scan(x, p["w_ih_f"], p["w_hh_f"], p["b_ih_f"], p["b_hh_f"])
    out_b = _gru_direction_scan(jnp.flip(x, 0),
                                p["w_ih_b"], p["w_hh_b"], p["b_ih_b"], p["b_hh_b"])
    return jnp.concatenate([out_f, jnp.flip(out_b, 0)], axis=-1)


# ----------------------------------------------------------------------------
# HIGRU forward
# ----------------------------------------------------------------------------
def higru_forward(x, short_params, long_params):
    """x: (B, T, out_dim*num_of_nodes)  ->  (B, 2*higru_out)."""
    _, T, _ = x.shape
    x_tm = jnp.transpose(x, (1, 0, 2))              # (T, B, D) time-major
    short = bigru_pallas(x_tm, short_params)        # (T, B, 2*higru_hid) Pallas
    long_input = short[T // 2]                      # == short_result[:, T//2, :]
    # PyTorch: unsqueeze(0) -> batch_first (1, B, 2*hid): seq len = B, batch = 1.
    long_x_tm = long_input[:, None, :]              # time-major (B, 1, 2*hid)
    long_out = bigru_scan(long_x_tm, long_params)   # (B, 1, 2*higru_out)
    return long_out[:, 0, :]                        # (B, 2*higru_out)


def higru_forward_ref(x, short_params, long_params):
    _, T, _ = x.shape
    x_tm = jnp.transpose(x, (1, 0, 2))
    short = bigru_scan(x_tm, short_params)
    long_x = short[T // 2][:, None, :]
    long_out = bigru_scan(long_x, long_params)
    return long_out[:, 0, :]


# ----------------------------------------------------------------------------
# Deterministic parameter init (PyTorch GRU-style uniform(-1/sqrt(H), 1/sqrt(H)))
# ----------------------------------------------------------------------------
def init_gru_params(key, input_size, hidden_size):
    bound = 1.0 / float(hidden_size) ** 0.5
    keys = jax.random.split(key, 8)

    def u(k, shape):
        return jax.random.uniform(k, shape, jnp.float32, -bound, bound)

    p = {}
    for d, off in (("f", 0), ("b", 4)):
        p[f"w_ih_{d}"] = u(keys[off + 0], (input_size, 3 * hidden_size))
        p[f"w_hh_{d}"] = u(keys[off + 1], (hidden_size, 3 * hidden_size))
        p[f"b_ih_{d}"] = u(keys[off + 2], (1, 3 * hidden_size))
        p[f"b_hh_{d}"] = u(keys[off + 3], (1, 3 * hidden_size))
    return p


# ----------------------------------------------------------------------------
if __name__ == "__main__":
    # Module config: out_dim * num_of_nodes = GRU input dim.
    out_dim, num_of_nodes = 4, 8
    higru_hid, higru_out = 32, 16
    B, T = 2, 8
    D = out_dim * num_of_nodes

    key = jax.random.PRNGKey(0)
    kx, ks, kl = jax.random.split(key, 3)

    x = jax.random.normal(kx, (B, T, D), dtype=jnp.float32)
    short_params = init_gru_params(ks, D, higru_hid)
    long_params = init_gru_params(kl, 2 * higru_hid, higru_out)

    forward = jax.jit(higru_forward)
    result = jax.block_until_ready(forward(x, short_params, long_params))
    assert result.shape == (B, 2 * higru_out), result.shape

    # Validate the fused Pallas biGRU directly against the lax.scan reference.
    x_tm = jnp.transpose(x, (1, 0, 2))
    short_pl = jax.block_until_ready(jax.jit(bigru_pallas)(x_tm, short_params))
    short_ref = bigru_scan(x_tm, short_params)
    assert jnp.allclose(short_pl, short_ref, atol=1e-4, rtol=1e-4), (
        float(jnp.max(jnp.abs(short_pl - short_ref))))

    # Validate the full HIGRU forward against the pure-JAX reference.
    ref = higru_forward_ref(x, short_params, long_params)
    assert jnp.allclose(result, ref, atol=1e-4, rtol=1e-4), (
        float(jnp.max(jnp.abs(result - ref))))

    print("KERNEL_OK")
</pallas_src>

<mosaic_0001>
module attributes {stable_mosaic.version = 11 : i64} {
  func.func @_bigru_chunk_kernel(%arg0: i32, %arg1: memref<64x64xf32, #tpu.memory_space<vmem>>, %arg2: memref<64x384xf32, #tpu.memory_space<vmem>>, %arg3: memref<1x384xf32, #tpu.memory_space<vmem>>, %arg4: memref<128x384xf32, #tpu.memory_space<vmem>>, %arg5: memref<1x128xf32, #tpu.memory_space<vmem>>, %arg6: memref<64x128xf32, #tpu.memory_space<vmem>>, %arg7: memref<8x128xf32, #tpu.memory_space<vmem>>, %arg8: memref<64x384xf32, #tpu.memory_space<vmem>>) attributes {dimension_semantics = [#tpu.dimension_semantics<arbitrary>], iteration_bounds = array<i64: 1>, scalar_prefetch = 0 : i64, scratch_operands = 2 : i64, tpu.core_type = #tpu.core_type<tc>, window_params = [{transform_indices = @transform_0, window_bounds = array<i64: 64, 64>}, {pipeline_mode = #tpu.pipeline_mode<synchronous>, transform_indices = @transform_1, window_bounds = array<i64: 64, 384>}, {pipeline_mode = #tpu.pipeline_mode<synchronous>, transform_indices = @transform_2, window_bounds = array<i64: 1, 384>}, {pipeline_mode = #tpu.pipeline_mode<synchronous>, transform_indices = @transform_3, window_bounds = array<i64: 128, 384>}, {pipeline_mode = #tpu.pipeline_mode<synchronous>, transform_indices = @transform_4, window_bounds = array<i64: 1, 128>}, {transform_indices = @transform_5, window_bounds = array<i64: 64, 128>}]} {
    %c0_i32 = arith.constant 0 : i32
    %0 = arith.cmpi eq, %arg0, %c0_i32 : i32
    %1 = arith.extui %0 : i1 to i32
    %c0_i32_0 = arith.constant 0 : i32
    %2 = arith.cmpi ne, %1, %c0_i32_0 : i32
    scf.if %2 {
      %cst_73 = arith.constant 0.000000e+00 : f32
      %294 = vector.broadcast %cst_73 : f32 to vector<8x128xf32>
      %c0_74 = arith.constant 0 : index
      %c0_75 = arith.constant 0 : index
      %295 = vector.load %arg7[%c0_74, %c0_75] : memref<8x128xf32, #tpu.memory_space<vmem>>, vector<8x128xf32>
      tpu.vector_store %arg7[%c0_74, %c0_75], %294 {strides = array<i32>} : memref<8x128xf32, #tpu.memory_space<vmem>>, vector<8x128xf32>,
    } else {
    }
    %c0 = arith.constant 0 : index
    %c0_1 = arith.constant 0 : index
    %3 = vector.load %arg1[%c0, %c0_1] : memref<64x64xf32, #tpu.memory_space<vmem>>, vector<64x64xf32>
    %c0_2 = arith.constant 0 : index
    %c0_3 = arith.constant 0 : index
    %4 = vector.load %arg2[%c0_2, %c0_3] : memref<64x384xf32, #tpu.memory_space<vmem>>, vector<64x384xf32>
    %cst = arith.constant dense<0.000000e+00> : vector<64x384xf32>
    %5 = tpu.matmul %3, %4, %cst {dimension_numbers = #tpu.dot_dimension_numbers<[1], [0], [0], [1], [0, 0, 1, 1], [], []>} : vector<64x64xf32>, vector<64x384xf32>, vector<64x384xf32> -> vector<64x384xf32>
    %c0_4 = arith.constant 0 : index
    %c0_5 = arith.constant 0 : index
    %6 = vector.load %arg3[%c0_4, %c0_5] : memref<1x384xf32, #tpu.memory_space<vmem>>, vector<1x384xf32>
    %7 = vector.broadcast %6 : vector<1x384xf32> to vector<64x384xf32>
    %8 = arith.addf %5, %7 : vector<64x384xf32>
    %c0_6 = arith.constant 0 : index
    %c0_7 = arith.constant 0 : index
    %9 = vector.load %arg8[%c0_6, %c0_7] : memref<64x384xf32, #tpu.memory_space<vmem>>, vector<64x384xf32>
    tpu.vector_store %arg8[%c0_6, %c0_7], %8 {strides = array<i32>} : memref<64x384xf32, #tpu.memory_space<vmem>>, vector<64x384xf32>,
    %c0_8 = arith.constant 0 : index
    %c0_9 = arith.constant 0 : index
    %10 = vector.load %arg4[%c0_8, %c0_9] : memref<128x384xf32, #tpu.memory_space<vmem>>, vector<128x384xf32>
    %c0_10 = arith.constant 0 : index
    %c0_11 = arith.constant 0 : index
    %11 = vector.load %arg5[%c0_10, %c0_11] : memref<1x128xf32, #tpu.memory_space<vmem>>, vector<1x128xf32>
    %c0_12 = arith.constant 0 : index
    %c0_13 = arith.constant 0 : index
    %12 = vector.load %arg7[%c0_12, %c0_13] : memref<8x128xf32, #tpu.memory_space<vmem>>, vector<8x128xf32>
    %c0_i32_14 = arith.constant 0 : i32
    %c8_i32 = arith.constant 8 : i32
    %13 = arith.muli %c0_i32_14, %c8_i32 : i32
    %14 = tpu.assume_multiple %13, 8 : i32
    %15 = arith.index_cast %14 : i32 to index
    %c0_15 = arith.constant 0 : index
    %16 = vector.load %arg8[%15, %c0_15] : memref<64x384xf32, #tpu.memory_space<vmem>>, vector<8x384xf32>
    %cst_16 = arith.constant dense<0.000000e+00> : vector<8x384xf32>
    %17 = tpu.matmul %12, %10, %cst_16 {dimension_numbers = #tpu.dot_dimension_numbers<[1], [0], [0], [1], [0, 0, 1, 1], [], []>} : vector<8x128xf32>, vector<128x384xf32>, vector<8x384xf32> -> vector<8x384xf32>
    %18 = vector.extract_strided_slice %16 {offsets = [0, 0], sizes = [8, 128], strides = [1, 1]} : vector<8x384xf32> to vector<8x128xf32>
    %19 = vector.extract_strided_slice %17 {offsets = [0, 0], sizes = [8, 128], strides = [1, 1]} : vector<8x384xf32> to vector<8x128xf32>
    %20 = arith.addf %18, %19 : vector<8x128xf32>
    %21 = arith.negf %20 : vector<8x128xf32>
    %22 = math.exp %21 : vector<8x128xf32>
    %cst_17 = arith.constant 1.000000e+00 : f32
    %23 = vector.broadcast %cst_17 : f32 to vector<8x128xf32>
    %24 = arith.addf %23, %22 : vector<8x128xf32>
    %25 = arith.divf %23, %24 : vector<8x128xf32>
    %26 = vector.extract_strided_slice %16 {offsets = [0, 128], sizes = [8, 128], strides = [1, 1]} : vector<8x384xf32> to vector<8x128xf32>
    %27 = vector.extract_strided_slice %17 {offsets = [0, 128], sizes = [8, 128], strides = [1, 1]} : vector<8x384xf32> to vector<8x128xf32>
    %28 = arith.addf %26, %27 : vector<8x128xf32>
    %29 = arith.negf %28 : vector<8x128xf32>
    %30 = math.exp %29 : vector<8x128xf32>
    %cst_18 = arith.constant 1.000000e+00 : f32
    %31 = vector.broadcast %cst_18 : f32 to vector<8x128xf32>
    %32 = arith.addf %31, %30 : vector<8x128xf32>
    %33 = arith.divf %31, %32 : vector<8x128xf32>
    %34 = vector.extract_strided_slice %16 {offsets = [0, 256], sizes = [8, 128], strides = [1, 1]} : vector<8x384xf32> to vector<8x128xf32>
    %35 = vector.extract_strided_slice %17 {offsets = [0, 256], sizes = [8, 128], strides = [1, 1]} : vector<8x384xf32> to vector<8x128xf32>
    %36 = vector.broadcast %11 : vector<1x128xf32> to vector<8x128xf32>
    %37 = arith.addf %35, %36 : vector<8x128xf32>
    %38 = arith.mulf %25, %37 : vector<8x128xf32>
    %39 = arith.addf %34, %38 : vector<8x128xf32>
    %40 = math.tanh %39 : vector<8x128xf32>
    %cst_19 = arith.constant 1.000000e+00 : f32
    %41 = vector.broadcast %cst_19 : f32 to vector<8x128xf32>
    %42 = arith.subf %41, %33 : vector<8x128xf32>
    %43 = arith.mulf %42, %40 : vector<8x128xf32>
    %44 = arith.mulf %33, %12 : vector<8x128xf32>
    %45 = arith.addf %43, %44 : vector<8x128xf32>
    %46 = arith.index_cast %14 : i32 to index
    %c0_20 = arith.constant 0 : index
    %47 = vector.load %arg6[%46, %c0_20] : memref<64x128xf32, #tpu.memory_space<vmem>>, vector<8x128xf32>
    tpu.vector_store %arg6[%46, %c0_20], %45 {strides = array<i32>} : memref<64x128xf32, #tpu.memory_space<vmem>>, vector<8x128xf32>,
    %c1_i32 = arith.constant 1 : i32
    %c8_i32_21 = arith.constant 8 : i32
    %48 = arith.muli %c1_i32, %c8_i32_21 : i32
    %49 = tpu.assume_multiple %48, 8 : i32
    %50 = arith.index_cast %49 : i32 to index
    %c0_22 = arith.constant 0 : index
    %51 = vector.load %arg8[%50, %c0_22] : memref<64x384xf32, #tpu.memory_space<vmem>>, vector<8x384xf32>
    %cst_23 = arith.constant dense<0.000000e+00> : vector<8x384xf32>
    %52 = tpu.matmul %45, %10, %cst_23 {dimension_numbers = #tpu.dot_dimension_numbers<[1], [0], [0], [1], [0, 0, 1, 1], [], []>} : vector<8x128xf32>, vector<128x384xf32>, vector<8x384xf32> -> vector<8x384xf32>
    %53 = vector.extract_strided_slice %51 {offsets = [0, 0], sizes = [8, 128], strides = [1, 1]} : vector<8x384xf32> to vector<8x128xf32>
    %54 = vector.extract_strided_slice %52 {offsets = [0, 0], sizes = [8, 128], strides = [1, 1]} : vector<8x384xf32> to vector<8x128xf32>
    %55 = arith.addf %53, %54 : vector<8x128xf32>
    %56 = arith.negf %55 : vector<8x128xf32>
    %57 = math.exp %56 : vector<8x128xf32>
    %cst_24 = arith.constant 1.000000e+00 : f32
    %58 = vector.broadcast %cst_24 : f32 to vector<8x128xf32>
    %59 = arith.addf %58, %57 : vector<8x128xf32>
    %60 = arith.divf %58, %59 : vector<8x128xf32>
    %61 = vector.extract_strided_slice %51 {offsets = [0, 128], sizes = [8, 128], strides = [1, 1]} : vector<8x384xf32> to vector<8x128xf32>
    %62 = vector.extract_strided_slice %52 {offsets = [0, 128], sizes = [8, 128], strides = [1, 1]} : vector<8x384xf32> to vector<8x128xf32>
    %63 = arith.addf %61, %62 : vector<8x128xf32>
    %64 = arith.negf %63 : vector<8x128xf32>
    %65 = math.exp %64 : vector<8x128xf32>
    %cst_25 = arith.constant 1.000000e+00 : f32
    %66 = vector.broadcast %cst_25 : f32 to vector<8x128xf32>
    %67 = arith.addf %66, %65 : vector<8x128xf32>
    %68 = arith.divf %66, %67 : vector<8x128xf32>
    %69 = vector.extract_strided_slice %51 {offsets = [0, 256], sizes = [8, 128], strides = [1, 1]} : vector<8x384xf32> to vector<8x128xf32>
    %70 = vector.extract_strided_slice %52 {offsets = [0, 256], sizes = [8, 128], strides = [1, 1]} : vector<8x384xf32> to vector<8x128xf32>
    %71 = vector.broadcast %11 : vector<1x128xf32> to vector<8x128xf32>
    %72 = arith.addf %70, %71 : vector<8x128xf32>
    %73 = arith.mulf %60, %72 : vector<8x128xf32>
    %74 = arith.addf %69, %73 : vector<8x128xf32>
    %75 = math.tanh %74 : vector<8x128xf32>
    %cst_26 = arith.constant 1.000000e+00 : f32
    %76 = vector.broadcast %cst_26 : f32 to vector<8x128xf32>
    %77 = arith.subf %76, %68 : vector<8x128xf32>
    %78 = arith.mulf %77, %75 : vector<8x128xf32>
    %79 = arith.mulf %68, %45 : vector<8x128xf32>
    %80 = arith.addf %78, %79 : vector<8x128xf32>
    %81 = arith.index_cast %49 : i32 to index
    %c0_27 = arith.constant 0 : index
    %82 = vector.load %arg6[%81, %c0_27] : memref<64x128xf32, #tpu.memory_space<vmem>>, vector<8x128xf32>
    tpu.vector_store %arg6[%81, %c0_27], %80 {strides = array<i32>} : memref<64x128xf32, #tpu.memory_space<vmem>>, vector<8x128xf32>,
    %c2_i32 = arith.constant 2 : i32
    %c8_i32_28 = arith.constant 8 : i32
    %83 = arith.muli %c2_i32, %c8_i32_28 : i32
    %84 = tpu.assume_multiple %83, 8 : i32
    %85 = arith.index_cast %84 : i32 to index
    %c0_29 = arith.constant 0 : index
    %86 = vector.load %arg8[%85, %c0_29] : memref<64x384xf32, #tpu.memory_space<vmem>>, vector<8x384xf32>
    %cst_30 = arith.constant dense<0.000000e+00> : vector<8x384xf32>
    %87 = tpu.matmul %80, %10, %cst_30 {dimension_numbers = #tpu.dot_dimension_numbers<[1], [0], [0], [1], [0, 0, 1, 1], [], []>} : vector<8x128xf32>, vector<128x384xf32>, vector<8x384xf32> -> vector<8x384xf32>
    %88 = vector.extract_strided_slice %86 {offsets = [0, 0], sizes = [8, 128], strides = [1, 1]} : vector<8x384xf32> to vector<8x128xf32>
    %89 = vector.extract_strided_slice %87 {offsets = [0, 0], sizes = [8, 128], strides = [1, 1]} : vector<8x384xf32> to vector<8x128xf32>
    %90 = arith.addf %88, %89 : vector<8x128xf32>
    %91 = arith.negf %90 : vector<8x128xf32>
    %92 = math.exp %91 : vector<8x128xf32>
    %cst_31 = arith.constant 1.000000e+00 : f32
    %93 = vector.broadcast %cst_31 : f32 to vector<8x128xf32>
    %94 = arith.addf %93, %92 : vector<8x128xf32>
    %95 = arith.divf %93, %94 : vector<8x128xf32>
    %96 = vector.extract_strided_slice %86 {offsets = [0, 128], sizes = [8, 128], strides = [1, 1]} : vector<8x384xf32> to vector<8x128xf32>
    %97 = vector.extract_strided_slice %87 {offsets = [0, 128], sizes = [8, 128], strides = [1, 1]} : vector<8x384xf32> to vector<8x128xf32>
    %98 = arith.addf %96, %97 : vector<8x128xf32>
    %99 = arith.negf %98 : vector<8x128xf32>
    %100 = math.exp %99 : vector<8x128xf32>
    %cst_32 = arith.constant 1.000000e+00 : f32
    %101 = vector.broadcast %cst_32 : f32 to vector<8x128xf32>
    %102 = arith.addf %101, %100 : vector<8x128xf32>
    %103 = arith.divf %101, %102 : vector<8x128xf32>
    %104 = vector.extract_strided_slice %86 {offsets = [0, 256], sizes = [8, 128], strides = [1, 1]} : vector<8x384xf32> to vector<8x128xf32>
    %105 = vector.extract_strided_slice %87 {offsets = [0, 256], sizes = [8, 128], strides = [1, 1]} : vector<8x384xf32> to vector<8x128xf32>
    %106 = vector.broadcast %11 : vector<1x128xf32> to vector<8x128xf32>
    %107 = arith.addf %105, %106 : vector<8x128xf32>
    %108 = arith.mulf %95, %107 : vector<8x128xf32>
    %109 = arith.addf %104, %108 : vector<8x128xf32>
    %110 = math.tanh %109 : vector<8x128xf32>
    %cst_33 = arith.constant 1.000000e+00 : f32
    %111 = vector.broadcast %cst_33 : f32 to vector<8x128xf32>
    %112 = arith.subf %111, %103 : vector<8x128xf32>
    %113 = arith.mulf %112, %110 : vector<8x128xf32>
    %114 = arith.mulf %103, %80 : vector<8x128xf32>
    %115 = arith.addf %113, %114 : vector<8x128xf32>
    %116 = arith.index_cast %84 : i32 to index
    %c0_34 = arith.constant 0 : index
    %117 = vector.load %arg6[%116, %c0_34] : memref<64x128xf32, #tpu.memory_space<vmem>>, vector<8x128xf32>
    tpu.vector_store %arg6[%116, %c0_34], %115 {strides = array<i32>} : memref<64x128xf32, #tpu.memory_space<vmem>>, vector<8x128xf32>,
    %c3_i32 = arith.constant 3 : i32
    %c8_i32_35 = arith.constant 8 : i32
    %118 = arith.muli %c3_i32, %c8_i32_35 : i32
    %119 = tpu.assume_multiple %118, 8 : i32
    %120 = arith.index_cast %119 : i32 to index
    %c0_36 = arith.constant 0 : index
    %121 = vector.load %arg8[%120, %c0_36] : memref<64x384xf32, #tpu.memory_space<vmem>>, vector<8x384xf32>
    %cst_37 = arith.constant dense<0.000000e+00> : vector<8x384xf32>
    %122 = tpu.matmul %115, %10, %cst_37 {dimension_numbers = #tpu.dot_dimension_numbers<[1], [0], [0], [1], [0, 0, 1, 1], [], []>} : vector<8x128xf32>, vector<128x384xf32>, vector<8x384xf32> -> vector<8x384xf32>
    %123 = vector.extract_strided_slice %121 {offsets = [0, 0], sizes = [8, 128], strides = [1, 1]} : vector<8x384xf32> to vector<8x128xf32>
    %124 = vector.extract_strided_slice %122 {offsets = [0, 0], sizes = [8, 128], strides = [1, 1]} : vector<8x384xf32> to vector<8x128xf32>
    %125 = arith.addf %123, %124 : vector<8x128xf32>
    %126 = arith.negf %125 : vector<8x128xf32>
    %127 = math.exp %126 : vector<8x128xf32>
    %cst_38 = arith.constant 1.000000e+00 : f32
    %128 = vector.broadcast %cst_38 : f32 to vector<8x128xf32>
    %129 = arith.addf %128, %127 : vector<8x128xf32>
    %130 = arith.divf %128, %129 : vector<8x128xf32>
    %131 = vector.extract_strided_slice %121 {offsets = [0, 128], sizes = [8, 128], strides = [1, 1]} : vector<8x384xf32> to vector<8x128xf32>
    %132 = vector.extract_strided_slice %122 {offsets = [0, 128], sizes = [8, 128], strides = [1, 1]} : vector<8x384xf32> to vector<8x128xf32>
    %133 = arith.addf %131, %132 : vector<8x128xf32>
    %134 = arith.negf %133 : vector<8x128xf32>
    %135 = math.exp %134 : vector<8x128xf32>
    %cst_39 = arith.constant 1.000000e+00 : f32
    %136 = vector.broadcast %cst_39 : f32 to vector<8x128xf32>
    %137 = arith.addf %136, %135 : vector<8x128xf32>
    %138 = arith.divf %136, %137 : vector<8x128xf32>
    %139 = vector.extract_strided_slice %121 {offsets = [0, 256], sizes = [8, 128], strides = [1, 1]} : vector<8x384xf32> to vector<8x128xf32>
    %140 = vector.extract_strided_slice %122 {offsets = [0, 256], sizes = [8, 128], strides = [1, 1]} : vector<8x384xf32> to vector<8x128xf32>
    %141 = vector.broadcast %11 : vector<1x128xf32> to vector<8x128xf32>
    %142 = arith.addf %140, %141 : vector<8x128xf32>
    %143 = arith.mulf %130, %142 : vector<8x128xf32>
    %144 = arith.addf %139, %143 : vector<8x128xf32>
    %145 = math.tanh %144 : vector<8x128xf32>
    %cst_40 = arith.constant 1.000000e+00 : f32
    %146 = vector.broadcast %cst_40 : f32 to vector<8x128xf32>
    %147 = arith.subf %146, %138 : vector<8x128xf32>
    %148 = arith.mulf %147, %145 : vector<8x128xf32>
    %149 = arith.mulf %138, %115 : vector<8x128xf32>
    %150 = arith.addf %148, %149 : vector<8x128xf32>
    %151 = arith.index_cast %119 : i32 to index
    %c0_41 = arith.constant 0 : index
    %152 = vector.load %arg6[%151, %c0_41] : memref<64x128xf32, #tpu.memory_space<vmem>>, vector<8x128xf32>
    tpu.vector_store %arg6[%151, %c0_41], %150 {strides = array<i32>} : memref<64x128xf32, #tpu.memory_space<vmem>>, vector<8x128xf32>,
    %c4_i32 = arith.constant 4 : i32
    %c8_i32_42 = arith.constant 8 : i32
    %153 = arith.muli %c4_i32, %c8_i32_42 : i32
    %154 = tpu.assume_multiple %153, 8 : i32
    %155 = arith.index_cast %154 : i32 to index
    %c0_43 = arith.constant 0 : index
    %156 = vector.load %arg8[%155, %c0_43] : memref<64x384xf32, #tpu.memory_space<vmem>>, vector<8x384xf32>
    %cst_44 = arith.constant dense<0.000000e+00> : vector<8x384xf32>
    %157 = tpu.matmul %150, %10, %cst_44 {dimension_numbers = #tpu.dot_dimension_numbers<[1], [0], [0], [1], [0, 0, 1, 1], [], []>} : vector<8x128xf32>, vector<128x384xf32>, vector<8x384xf32> -> vector<8x384xf32>
    %158 = vector.extract_strided_slice %156 {offsets = [0, 0], sizes = [8, 128], strides = [1, 1]} : vector<8x384xf32> to vector<8x128xf32>
    %159 = vector.extract_strided_slice %157 {offsets = [0, 0], sizes = [8, 128], strides = [1, 1]} : vector<8x384xf32> to vector<8x128xf32>
    %160 = arith.addf %158, %159 : vector<8x128xf32>
    %161 = arith.negf %160 : vector<8x128xf32>
    %162 = math.exp %161 : vector<8x128xf32>
    %cst_45 = arith.constant 1.000000e+00 : f32
    %163 = vector.broadcast %cst_45 : f32 to vector<8x128xf32>
    %164 = arith.addf %163, %162 : vector<8x128xf32>
    %165 = arith.divf %163, %164 : vector<8x128xf32>
    %166 = vector.extract_strided_slice %156 {offsets = [0, 128], sizes = [8, 128], strides = [1, 1]} : vector<8x384xf32> to vector<8x128xf32>
    %167 = vector.extract_strided_slice %157 {offsets = [0, 128], sizes = [8, 128], strides = [1, 1]} : vector<8x384xf32> to vector<8x128xf32>
    %168 = arith.addf %166, %167 : vector<8x128xf32>
    %169 = arith.negf %168 : vector<8x128xf32>
    %170 = math.exp %169 : vector<8x128xf32>
    %cst_46 = arith.constant 1.000000e+00 : f32
    %171 = vector.broadcast %cst_46 : f32 to vector<8x128xf32>
    %172 = arith.addf %171, %170 : vector<8x128xf32>
    %173 = arith.divf %171, %172 : vector<8x128xf32>
    %174 = vector.extract_strided_slice %156 {offsets = [0, 256], sizes = [8, 128], strides = [1, 1]} : vector<8x384xf32> to vector<8x128xf32>
    %175 = vector.extract_strided_slice %157 {offsets = [0, 256], sizes = [8, 128], strides = [1, 1]} : vector<8x384xf32> to vector<8x128xf32>
    %176 = vector.broadcast %11 : vector<1x128xf32> to vector<8x128xf32>
    %177 = arith.addf %175, %176 : vector<8x128xf32>
    %178 = arith.mulf %165, %177 : vector<8x128xf32>
    %179 = arith.addf %174, %178 : vector<8x128xf32>
    %180 = math.tanh %179 : vector<8x128xf32>
    %cst_47 = arith.constant 1.000000e+00 : f32
    %181 = vector.broadcast %cst_47 : f32 to vector<8x128xf32>
    %182 = arith.subf %181, %173 : vector<8x128xf32>
    %183 = arith.mulf %182, %180 : vector<8x128xf32>
    %184 = arith.mulf %173, %150 : vector<8x128xf32>
    %185 = arith.addf %183, %184 : vector<8x128xf32>
    %186 = arith.index_cast %154 : i32 to index
    %c0_48 = arith.constant 0 : index
    %187 = vector.load %arg6[%186, %c0_48] : memref<64x128xf32, #tpu.memory_space<vmem>>, vector<8x128xf32>
    tpu.vector_store %arg6[%186, %c0_48], %185 {strides = array<i32>} : memref<64x128xf32, #tpu.memory_space<vmem>>, vector<8x128xf32>,
    %c5_i32 = arith.constant 5 : i32
    %c8_i32_49 = arith.constant 8 : i32
    %188 = arith.muli %c5_i32, %c8_i32_49 : i32
    %189 = tpu.assume_multiple %188, 8 : i32
    %190 = arith.index_cast %189 : i32 to index
    %c0_50 = arith.constant 0 : index
    %191 = vector.load %arg8[%190, %c0_50] : memref<64x384xf32, #tpu.memory_space<vmem>>, vector<8x384xf32>
    %cst_51 = arith.constant dense<0.000000e+00> : vector<8x384xf32>
    %192 = tpu.matmul %185, %10, %cst_51 {dimension_numbers = #tpu.dot_dimension_numbers<[1], [0], [0], [1], [0, 0, 1, 1], [], []>} : vector<8x128xf32>, vector<128x384xf32>, vector<8x384xf32> -> vector<8x384xf32>
    %193 = vector.extract_strided_slice %191 {offsets = [0, 0], sizes = [8, 128], strides = [1, 1]} : vector<8x384xf32> to vector<8x128xf32>
    %194 = vector.extract_strided_slice %192 {offsets = [0, 0], sizes = [8, 128], strides = [1, 1]} : vector<8x384xf32> to vector<8x128xf32>
    %195 = arith.addf %193, %194 : vector<8x128xf32>
    %196 = arith.negf %195 : vector<8x128xf32>
    %197 = math.exp %196 : vector<8x128xf32>
    %cst_52 = arith.constant 1.000000e+00 : f32
    %198 = vector.broadcast %cst_52 : f32 to vector<8x128xf32>
    %199 = arith.addf %198, %197 : vector<8x128xf32>
    %200 = arith.divf %198, %199 : vector<8x128xf32>
    %201 = vector.extract_strided_slice %191 {offsets = [0, 128], sizes = [8, 128], strides = [1, 1]} : vector<8x384xf32> to vector<8x128xf32>
    %202 = vector.extract_strided_slice %192 {offsets = [0, 128], sizes = [8, 128], strides = [1, 1]} : vector<8x384xf32> to vector<8x128xf32>
    %203 = arith.addf %201, %202 : vector<8x128xf32>
    %204 = arith.negf %203 : vector<8x128xf32>
    %205 = math.exp %204 : vector<8x128xf32>
    %cst_53 = arith.constant 1.000000e+00 : f32
    %206 = vector.broadcast %cst_53 : f32 to vector<8x128xf32>
    %207 = arith.addf %206, %205 : vector<8x128xf32>
    %208 = arith.divf %206, %207 : vector<8x128xf32>
    %209 = vector.extract_strided_slice %191 {offsets = [0, 256], sizes = [8, 128], strides = [1, 1]} : vector<8x384xf32> to vector<8x128xf32>
    %210 = vector.extract_strided_slice %192 {offsets = [0, 256], sizes = [8, 128], strides = [1, 1]} : vector<8x384xf32> to vector<8x128xf32>
    %211 = vector.broadcast %11 : vector<1x128xf32> to vector<8x128xf32>
    %212 = arith.addf %210, %211 : vector<8x128xf32>
    %213 = arith.mulf %200, %212 : vector<8x128xf32>
    %214 = arith.addf %209, %213 : vector<8x128xf32>
    %215 = math.tanh %214 : vector<8x128xf32>
    %cst_54 = arith.constant 1.000000e+00 : f32
    %216 = vector.broadcast %cst_54 : f32 to vector<8x128xf32>
    %217 = arith.subf %216, %208 : vector<8x128xf32>
    %218 = arith.mulf %217, %215 : vector<8x128xf32>
    %219 = arith.mulf %208, %185 : vector<8x128xf32>
    %220 = arith.addf %218, %219 : vector<8x128xf32>
    %221 = arith.index_cast %189 : i32 to index
    %c0_55 = arith.constant 0 : index
    %222 = vector.load %arg6[%221, %c0_55] : memref<64x128xf32, #tpu.memory_space<vmem>>, vector<8x128xf32>
    tpu.vector_store %arg6[%221, %c0_55], %220 {strides = array<i32>} : memref<64x128xf32, #tpu.memory_space<vmem>>, vector<8x128xf32>,
    %c6_i32 = arith.constant 6 : i32
    %c8_i32_56 = arith.constant 8 : i32
    %223 = arith.muli %c6_i32, %c8_i32_56 : i32
    %224 = tpu.assume_multiple %223, 8 : i32
    %225 = arith.index_cast %224 : i32 to index
    %c0_57 = arith.constant 0 : index
    %226 = vector.load %arg8[%225, %c0_57] : memref<64x384xf32, #tpu.memory_space<vmem>>, vector<8x384xf32>
    %cst_58 = arith.constant dense<0.000000e+00> : vector<8x384xf32>
    %227 = tpu.matmul %220, %10, %cst_58 {dimension_numbers = #tpu.dot_dimension_numbers<[1], [0], [0], [1], [0, 0, 1, 1], [], []>} : vector<8x128xf32>, vector<128x384xf32>, vector<8x384xf32> -> vector<8x384xf32>
    %228 = vector.extract_strided_slice %226 {offsets = [0, 0], sizes = [8, 128], strides = [1, 1]} : vector<8x384xf32> to vector<8x128xf32>
    %229 = vector.extract_strided_slice %227 {offsets = [0, 0], sizes = [8, 128], strides = [1, 1]} : vector<8x384xf32> to vector<8x128xf32>
    %230 = arith.addf %228, %229 : vector<8x128xf32>
    %231 = arith.negf %230 : vector<8x128xf32>
    %232 = math.exp %231 : vector<8x128xf32>
    %cst_59 = arith.constant 1.000000e+00 : f32
    %233 = vector.broadcast %cst_59 : f32 to vector<8x128xf32>
    %234 = arith.addf %233, %232 : vector<8x128xf32>
    %235 = arith.divf %233, %234 : vector<8x128xf32>
    %236 = vector.extract_strided_slice %226 {offsets = [0, 128], sizes = [8, 128], strides = [1, 1]} : vector<8x384xf32> to vector<8x128xf32>
    %237 = vector.extract_strided_slice %227 {offsets = [0, 128], sizes = [8, 128], strides = [1, 1]} : vector<8x384xf32> to vector<8x128xf32>
    %238 = arith.addf %236, %237 : vector<8x128xf32>
    %239 = arith.negf %238 : vector<8x128xf32>
    %240 = math.exp %239 : vector<8x128xf32>
    %cst_60 = arith.constant 1.000000e+00 : f32
    %241 = vector.broadcast %cst_60 : f32 to vector<8x128xf32>
    %242 = arith.addf %241, %240 : vector<8x128xf32>
    %243 = arith.divf %241, %242 : vector<8x128xf32>
    %244 = vector.extract_strided_slice %226 {offsets = [0, 256], sizes = [8, 128], strides = [1, 1]} : vector<8x384xf32> to vector<8x128xf32>
    %245 = vector.extract_strided_slice %227 {offsets = [0, 256], sizes = [8, 128], strides = [1, 1]} : vector<8x384xf32> to vector<8x128xf32>
    %246 = vector.broadcast %11 : vector<1x128xf32> to vector<8x128xf32>
    %247 = arith.addf %245, %246 : vector<8x128xf32>
    %248 = arith.mulf %235, %247 : vector<8x128xf32>
    %249 = arith.addf %244, %248 : vector<8x128xf32>
    %250 = math.tanh %249 : vector<8x128xf32>
    %cst_61 = arith.constant 1.000000e+00 : f32
    %251 = vector.broadcast %cst_61 : f32 to vector<8x128xf32>
    %252 = arith.subf %251, %243 : vector<8x128xf32>
    %253 = arith.mulf %252, %250 : vector<8x128xf32>
    %254 = arith.mulf %243, %220 : vector<8x128xf32>
    %255 = arith.addf %253, %254 : vector<8x128xf32>
    %256 = arith.index_cast %224 : i32 to index
    %c0_62 = arith.constant 0 : index
    %257 = vector.load %arg6[%256, %c0_62] : memref<64x128xf32, #tpu.memory_space<vmem>>, vector<8x128xf32>
    tpu.vector_store %arg6[%256, %c0_62], %255 {strides = array<i32>} : memref<64x128xf32, #tpu.memory_space<vmem>>, vector<8x128xf32>,
    %c7_i32 = arith.constant 7 : i32
    %c8_i32_63 = arith.constant 8 : i32
    %258 = arith.muli %c7_i32, %c8_i32_63 : i32
    %259 = tpu.assume_multiple %258, 8 : i32
    %260 = arith.index_cast %259 : i32 to index
    %c0_64 = arith.constant 0 : index
    %261 = vector.load %arg8[%260, %c0_64] : memref<64x384xf32, #tpu.memory_space<vmem>>, vector<8x384xf32>
    %cst_65 = arith.constant dense<0.000000e+00> : vector<8x384xf32>
    %262 = tpu.matmul %255, %10, %cst_65 {dimension_numbers = #tpu.dot_dimension_numbers<[1], [0], [0], [1], [0, 0, 1, 1], [], []>} : vector<8x128xf32>, vector<128x384xf32>, vector<8x384xf32> -> vector<8x384xf32>
    %263 = vector.extract_strided_slice %261 {offsets = [0, 0], sizes = [8, 128], strides = [1, 1]} : vector<8x384xf32> to vector<8x128xf32>
    %264 = vector.extract_strided_slice %262 {offsets = [0, 0], sizes = [8, 128], strides = [1, 1]} : vector<8x384xf32> to vector<8x128xf32>
    %265 = arith.addf %263, %264 : vector<8x128xf32>
    %266 = arith.negf %265 : vector<8x128xf32>
    %267 = math.exp %266 : vector<8x128xf32>
    %cst_66 = arith.constant 1.000000e+00 : f32
    %268 = vector.broadcast %cst_66 : f32 to vector<8x128xf32>
    %269 = arith.addf %268, %267 : vector<8x128xf32>
    %270 = arith.divf %268, %269 : vector<8x128xf32>
    %271 = vector.extract_strided_slice %261 {offsets = [0, 128], sizes = [8, 128], strides = [1, 1]} : vector<8x384xf32> to vector<8x128xf32>
    %272 = vector.extract_strided_slice %262 {offsets = [0, 128], sizes = [8, 128], strides = [1, 1]} : vector<8x384xf32> to vector<8x128xf32>
    %273 = arith.addf %271, %272 : vector<8x128xf32>
    %274 = arith.negf %273 : vector<8x128xf32>
    %275 = math.exp %274 : vector<8x128xf32>
    %cst_67 = arith.constant 1.000000e+00 : f32
    %276 = vector.broadcast %cst_67 : f32 to vector<8x128xf32>
    %277 = arith.addf %276, %275 : vector<8x128xf32>
    %278 = arith.divf %276, %277 : vector<8x128xf32>
    %279 = vector.extract_strided_slice %261 {offsets = [0, 256], sizes = [8, 128], strides = [1, 1]} : vector<8x384xf32> to vector<8x128xf32>
    %280 = vector.extract_strided_slice %262 {offsets = [0, 256], sizes = [8, 128], strides = [1, 1]} : vector<8x384xf32> to vector<8x128xf32>
    %281 = vector.broadcast %11 : vector<1x128xf32> to vector<8x128xf32>
    %282 = arith.addf %280, %281 : vector<8x128xf32>
    %283 = arith.mulf %270, %282 : vector<8x128xf32>
    %284 = arith.addf %279, %283 : vector<8x128xf32>
    %285 = math.tanh %284 : vector<8x128xf32>
    %cst_68 = arith.constant 1.000000e+00 : f32
    %286 = vector.broadcast %cst_68 : f32 to vector<8x128xf32>
    %287 = arith.subf %286, %278 : vector<8x128xf32>
    %288 = arith.mulf %287, %285 : vector<8x128xf32>
    %289 = arith.mulf %278, %255 : vector<8x128xf32>
    %290 = arith.addf %288, %289 : vector<8x128xf32>
    %291 = arith.index_cast %259 : i32 to index
    %c0_69 = arith.constant 0 : index
    %292 = vector.load %arg6[%291, %c0_69] : memref<64x128xf32, #tpu.memory_space<vmem>>, vector<8x128xf32>
    tpu.vector_store %arg6[%291, %c0_69], %290 {strides = array<i32>} : memref<64x128xf32, #tpu.memory_space<vmem>>, vector<8x128xf32>,
    %c8_i32_70 = arith.constant 8 : i32
    %c0_71 = arith.constant 0 : index
    %c0_72 = arith.constant 0 : index
    %293 = vector.load %arg7[%c0_71, %c0_72] : memref<8x128xf32, #tpu.memory_space<vmem>>, vector<8x128xf32>
    tpu.vector_store %arg7[%c0_71, %c0_72], %290 {strides = array<i32>} : memref<8x128xf32, #tpu.memory_space<vmem>>, vector<8x128xf32>,
    return
  }
  func.func @transform_0(%arg0: i32) -> (i32, i32) {
    %c0_i32 = arith.constant 0 : i32
    %c0_i32_0 = arith.constant 0 : i32
    return %arg0, %c0_i32 : i32, i32
  }
  func.func @transform_1(%arg0: i32) -> (i32, i32) {
    %c0_i32 = arith.constant 0 : i32
    %c0_i32_0 = arith.constant 0 : i32
    %c0_i32_1 = arith.constant 0 : i32
    return %c0_i32, %c0_i32_0 : i32, i32
  }
  func.func @transform_2(%arg0: i32) -> (i32, i32) {
    %c0_i32 = arith.constant 0 : i32
    %c0_i32_0 = arith.constant 0 : i32
    %c0_i32_1 = arith.constant 0 : i32
    return %c0_i32, %c0_i32_0 : i32, i32
  }
  func.func @transform_3(%arg0: i32) -> (i32, i32) {
    %c0_i32 = arith.constant 0 : i32
    %c0_i32_0 = arith.constant 0 : i32
    %c0_i32_1 = arith.constant 0 : i32
    return %c0_i32, %c0_i32_0 : i32, i32
  }
  func.func @transform_4(%arg0: i32) -> (i32, i32) {
    %c0_i32 = arith.constant 0 : i32
    %c0_i32_0 = arith.constant 0 : i32
    %c0_i32_1 = arith.constant 0 : i32
    return %c0_i32, %c0_i32_0 : i32, i32
  }
  func.func @transform_5(%arg0: i32) -> (i32, i32) {
    %c0_i32 = arith.constant 0 : i32
    %c0_i32_0 = arith.constant 0 : i32
    return %arg0, %c0_i32 : i32, i32
  }
}

</mosaic_0001>

<llo_original>
// kernel: custom-call.1
$region0: #{custom-call.1}
  %s0 = inlined_call_operand.vmem [shape: f32[1,16], index: 0, kind: output, shape index: {}]

// kernel: higru_forward.1
$region0: #{higru_forward.1}
  #allocation0 [shape = 'u32[]', space=smem, size = 0x4, offset = 0x4, fixed_abs, tag = 'smem constant byte address 0x4 - core index']
  #allocation1 [shape = 'u32[144,128]{1,0:T(1,128)}', space=vmem, size = 0x12000, scoped, tag = 'internal scratch']
  #allocation2 [shape = 'f32[8,128]{1,0:T(8,128)}', space=vmem, size = 0x1000, scoped, tag = 'scratch operand']
  #allocation3 [shape = 'f32[64,384]{1,0:T(8,128)}', space=vmem, size = 0x18000, scoped, tag = 'scratch operand']
  %s0 = inlined_call_operand.vmem [shape: f32[64,64], index: 0, kind: input, shape index: {}]
  %s1 = inlined_call_operand.vmem [shape: f32[64,384], index: 1, kind: input, shape index: {}]
  %s2 = inlined_call_operand.vmem [shape: f32[1,384], index: 2, kind: input, shape index: {}]
  %s3 = inlined_call_operand.vmem [shape: f32[128,384], index: 3, kind: input, shape index: {}]
  %s4 = inlined_call_operand.vmem [shape: f32[1,128], index: 4, kind: input, shape index: {}]
  %s5 = inlined_call_operand.vmem [shape: f32[64,128], index: 5, kind: output, shape index: {}]
  %s6 = sld [smem:[#allocation0]]
  $region34: #{higru_forward.1} parent=0
    _
  %s8 = ssub.s32 1, %s6
  %s9 = scalar_select 0, %s8, %s6
  // Predicated region
  $region2: #{higru_forward.1} parent=0 // pred_check
    _
  $region3: #{higru_forward.1} parent=0 // pred_check_branch
    %11 = sbr.rel (0) target = $region5
  $region4: #{higru_forward.1} parent=0 // pred_region
    _
  $region5: #{higru_forward.1} parent=0 // pred_fallthru
    _
  // Predicated region
  $region6: #{higru_forward.1} parent=0 // pred_check
    _
  $region7: #{higru_forward.1} parent=0 // pred_check_branch
    %13 = sbr.rel (0) target = $region9
  $region8: #{higru_forward.1} parent=0 // pred_region
    _
  $region9: #{higru_forward.1} parent=0 // pred_fallthru
    _
  // Predicated region
  $region10: #{higru_forward.1} parent=0 // pred_check
    _
  $region11: #{higru_forward.1} parent=0 // pred_check_branch
    %15 = sbr.rel (0) target = $region13
  $region12: #{higru_forward.1} parent=0 // pred_region
    _
  $region13: #{higru_forward.1} parent=0 // pred_fallthru
    _
  // Predicated region
  $region14: #{higru_forward.1} parent=0 // pred_check
    _
  $region15: #{higru_forward.1} parent=0 // pred_check_branch
    %17 = sbr.rel (0) target = $region17
  $region16: #{higru_forward.1} parent=0 // pred_region
    _
  $region17: #{higru_forward.1} parent=0 // pred_fallthru
    _
  // Predicated region
  $region18: #{higru_forward.1} parent=0 // pred_check
    _
  $region19: #{higru_forward.1} parent=0 // pred_check_branch
    %19 = sbr.rel (0) target = $region21
  $region20: #{higru_forward.1} parent=0 // pred_region
    _
  $region21: #{higru_forward.1} parent=0 // pred_fallthru
    _
  %p20 = scmp.eq.s32.totalorder 0, 0
  // Predicated region
  $region22: #{higru_forward.1} parent=0 // pred_check
    %p21 = pneg %p20
  $region23: #{higru_forward.1} parent=0 // pred_check_branch
    %23 = sbr.rel (%p21) target = $region25
  $region24: #{higru_forward.1} parent=0 // pred_region
    %24 = vst [vmem:[#allocation2] sm:$0xff] 0.0
  $region25: #{higru_forward.1} parent=0 // pred_fallthru
    _
  %v25 = vld [vmem:[%s0] sm:$0xff]
  %v26 = vld [vmem:[%s0 + $0x8] sm:$0xff]
  %v27 = vld [vmem:[%s0 + $0x10] sm:$0xff]
  %v28 = vld [vmem:[%s0 + $0x18] sm:$0xff]
  %v29 = vld [vmem:[%s0 + $0x20] sm:$0xff]
  %v30 = vld [vmem:[%s0 + $0x28] sm:$0xff]
  %v31 = vld [vmem:[%s0 + $0x30] sm:$0xff]
  %v32 = vld [vmem:[%s0 + $0x38] sm:$0xff]
  %v33 = vld [vmem:[%s1] sm:$0xff]
  %v34 = vld [vmem:[%s1 + $0x8] sm:$0xff]
  %v35 = vld [vmem:[%s1 + $0x10] sm:$0xff]
  %v36 = vld [vmem:[%s1 + $0x18] sm:$0xff]
  %v37 = vld [vmem:[%s1 + $0x20] sm:$0xff]
  %v38 = vld [vmem:[%s1 + $0x28] sm:$0xff]
  %v39 = vld [vmem:[%s1 + $0x30] sm:$0xff]
  %v40 = vld [vmem:[%s1 + $0x38] sm:$0xff]
  %v41 = vld [vmem:[%s1 + $0x40] sm:$0xff]
  %v42 = vld [vmem:[%s1 + $0x48] sm:$0xff]
  %v43 = vld [vmem:[%s1 + $0x50] sm:$0xff]
  %v44 = vld [vmem:[%s1 + $0x58] sm:$0xff]
  %v45 = vld [vmem:[%s1 + $0x60] sm:$0xff]
  %v46 = vld [vmem:[%s1 + $0x68] sm:$0xff]
  %v47 = vld [vmem:[%s1 + $0x70] sm:$0xff]
  %v48 = vld [vmem:[%s1 + $0x78] sm:$0xff]
  %v49 = vld [vmem:[%s1 + $0x80] sm:$0xff]
  %v50 = vld [vmem:[%s1 + $0x88] sm:$0xff]
  %v51 = vld [vmem:[%s1 + $0x90] sm:$0xff]
  %v52 = vld [vmem:[%s1 + $0x98] sm:$0xff]
  %v53 = vld [vmem:[%s1 + $0xa0] sm:$0xff]
  %v54 = vld [vmem:[%s1 + $0xa8] sm:$0xff]
  %v55 = vld [vmem:[%s1 + $0xb0] sm:$0xff]
  %v56 = vld [vmem:[%s1 + $0xb8] sm:$0xff]
  %v57 = vld [vmem:[%s2] sm:$0x7]
  %v59 = vlaneseq
  %v60 = vshrl.u32 %v59, 7
  %v61 = vsub.s32 0, %v60
  %v62 = vrot.slane %v57, %v61
  %v63 = vlaneseq
  %v64 = vshrl.u32 %v63, 7
  %v65 = vsub.s32 1, %v64
  %v66 = vrot.slane %v57, %v65
  %v67 = vlaneseq
  %v68 = vshrl.u32 %v67, 7
  %v69 = vsub.s32 2, %v68
  %v70 = vrot.slane %v57, %v69
  %vm74 = vcmask 523264
  %v76 = vsel %vm74, %v25, 0
  %v79 = vsel %vm74, %v26, 0
  %v82 = vsel %vm74, %v27, 0
  %v85 = vsel %vm74, %v28, 0
  %v88 = vsel %vm74, %v29, 0
  %v91 = vsel %vm74, %v30, 0
  %v94 = vsel %vm74, %v31, 0
  %v97 = vsel %vm74, %v32, 0
  %99 = vmatprep.subr.mxu0 %v34
  %100 = vmatpush1.msra.mxu0 %v33
  %101 = vmatprep.subr.mxu0 %v37
  %102 = vmatpush1.msra.mxu0 %v36
  %103 = vmatprep.subr.mxu0 %v40
  %104 = vmatpush1.msra.mxu0 %v39
  %105 = vmatprep.subr.mxu0 %v43
  %106 = vmatpush1.msra.mxu0 %v42
  %107 = vmatprep.subr.mxu0 %v46
  %108 = vmatpush1.msra.mxu0 %v45
  %109 = vmatprep.subr.mxu0 %v49
  %110 = vmatpush1.msra.mxu0 %v48
  %111 = vmatprep.subr.mxu0 %v52
  %112 = vmatpush1.msra.mxu0 %v51
  %113 = vmatprep.subr.mxu0 %v55
  %114 = vmatpush1.msra.mxu0 %v54
  %115 = vmatprep.subr.mxu0 0.0
  %116 = vmatpush1.msra.mxu0 0.0
  %117 = vmatprep.subr.mxu0 0.0
  %118 = vmatpush1.msra.mxu0 0.0
  %119 = vmatprep.subr.mxu0 0.0
  %120 = vmatpush1.msra.mxu0 0.0
  %121 = vmatprep.subr.mxu0 0.0
  %122 = vmatpush1.msra.mxu0 0.0
  %123 = vmatprep.subr.mxu0 0.0
  %124 = vmatpush1.msra.mxu0 0.0
  %125 = vmatprep.subr.mxu0 0.0
  %126 = vmatpush1.msra.mxu0 0.0
  %127 = vmatprep.subr.mxu0 0.0
  %128 = vmatpush1.msra.mxu0 0.0
  %129 = vmatprep.subr.mxu0 0.0
  %130 = vmatpush1.msra.mxu0 0.0
  %131 = vmatprep.subr.mxu0 0.0
  %132 = vmatpush1.msra.mxu0 0.0
  %133 = vmatprep.subr.mxu0 0.0
  %134 = vmatpush1.msra.mxu0 0.0
  %135 = vmatprep.subr.mxu0 0.0
  %136 = vmatpush1.msra.mxu0 0.0
  %137 = vmatprep.subr.mxu0 0.0
  %138 = vmatpush1.msra.mxu0 0.0
  %139 = vmatprep.subr.mxu0 0.0
  %140 = vmatpush1.msra.mxu0 0.0
  %141 = vmatprep.subr.mxu0 0.0
  %142 = vmatpush1.msra.mxu0 0.0
  %143 = vmatprep.subr.mxu0 0.0
  %144 = vmatpush1.msra.mxu0 0.0
  %145 = vmatprep.subr.mxu0 0.0
  %146 = vmatpush1.msra.mxu0 0.0
  %147 = vmatprep.subr.mxu0 0.0
  %148 = vmatpush1.msra.mxu0 0.0
  %149 = vmatprep.subr.mxu0 0.0
  %150 = vmatpush1.msra.mxu0 0.0
  %151 = vmatprep.subr.mxu0 0.0
  %152 = vmatpush1.msra.mxu0 0.0
  %153 = vmatprep.subr.mxu0 0.0
  %154 = vmatpush1.msra.mxu0 0.0
  %155 = vmatprep.subr.mxu0 0.0
  %156 = vmatpush1.msra.mxu0 0.0
  %157 = vmatprep.subr.mxu0 0.0
  %158 = vmatpush1.msra.mxu0 0.0
  %159 = vmatprep.subr.mxu0 0.0
  %160 = vmatpush1.msra.mxu0 0.0
  %161 = vmatprep.subr.mxu0 0.0
  %162 = vmatpush1.msra.mxu0 0.0
  %163 = vmatprep.mubr.f32.mxu0 0.0
  %164 = vmatmul.mubr.f32.gmra.mrb[0].mxu0 %v76
  %v165 = vpop.f32.mrb[0].mxu0
  %v166 = vadd.f32 %v62, %v165
  %v167 = vpop.f32.mrb[0].mxu0
  %v168 = vadd.f32 %v66, %v167
  %169 = vmatprep.mubr.f32.mxu0 0.0
  %170 = vmatmul.mubr.f32.gmra.mrb[0].mxu0 %v79
  %v171 = vpop.f32.mrb[0].mxu0
  %v172 = vadd.f32 %v62, %v171
  %v173 = vpop.f32.mrb[0].mxu0
  %v174 = vadd.f32 %v66, %v173
  %175 = vmatprep.mubr.f32.mxu0 0.0
  %176 = vmatmul.mubr.f32.gmra.mrb[0].mxu0 %v82
  %v177 = vpop.f32.mrb[0].mxu0
  %v178 = vadd.f32 %v62, %v177
  %v179 = vpop.f32.mrb[0].mxu0
  %v180 = vadd.f32 %v66, %v179
  %181 = vmatprep.mubr.f32.mxu0 0.0
  %182 = vmatmul.mubr.f32.gmra.mrb[0].mxu0 %v85
  %v183 = vpop.f32.mrb[0].mxu0
  %v184 = vadd.f32 %v62, %v183
  %v185 = vpop.f32.mrb[0].mxu0
  %v186 = vadd.f32 %v66, %v185
  %187 = vmatprep.mubr.f32.mxu0 0.0
  %188 = vmatmul.mubr.f32.gmra.mrb[0].mxu0 %v88
  %v189 = vpop.f32.mrb[0].mxu0
  %v190 = vadd.f32 %v62, %v189
  %v191 = vpop.f32.mrb[0].mxu0
  %v192 = vadd.f32 %v66, %v191
  %193 = vmatprep.mubr.f32.mxu0 0.0
  %194 = vmatmul.mubr.f32.gmra.mrb[0].mxu0 %v91
  %v195 = vpop.f32.mrb[0].mxu0
  %v196 = vadd.f32 %v62, %v195
  %v197 = vpop.f32.mrb[0].mxu0
  %v198 = vadd.f32 %v66, %v197
  %199 = vmatprep.mubr.f32.mxu0 0.0
  %200 = vmatmul.mubr.f32.gmra.mrb[0].mxu0 %v94
  %v201 = vpop.f32.mrb[0].mxu0
  %v202 = vadd.f32 %v62, %v201
  %v203 = vpop.f32.mrb[0].mxu0
  %v204 = vadd.f32 %v66, %v203
  %205 = vmatprep.mubr.f32.mxu0 0.0
  %206 = vmatmul.mubr.f32.gmra.mrb[0].mxu0 %v97
  %v207 = vpop.f32.mrb[0].mxu0
  %v208 = vadd.f32 %v62, %v207
  %v209 = vpop.f32.mrb[0].mxu0
  %v210 = vadd.f32 %v66, %v209
  %211 = vdwg.mxu0
  %212 = vmatprep.subr.mxu0 0.0
  %213 = vmatpush1.msra.mxu0 %v35
  %214 = vmatprep.subr.mxu0 0.0
  %215 = vmatpush1.msra.mxu0 %v38
  %216 = vmatprep.subr.mxu0 0.0
  %217 = vmatpush1.msra.mxu0 %v41
  %218 = vmatprep.subr.mxu0 0.0
  %219 = vmatpush1.msra.mxu0 %v44
  %220 = vmatprep.subr.mxu0 0.0
  %221 = vmatpush1.msra.mxu0 %v47
  %222 = vmatprep.subr.mxu0 0.0
  %223 = vmatpush1.msra.mxu0 %v50
  %224 = vmatprep.subr.mxu0 0.0
  %225 = vmatpush1.msra.mxu0 %v53
  %226 = vmatprep.subr.mxu0 0.0
  %227 = vmatpush1.msra.mxu0 %v56
  %228 = vmatprep.subr.mxu0 0.0
  %229 = vmatpush1.msra.mxu0 0.0
  %230 = vmatprep.subr.mxu0 0.0
  %231 = vmatpush1.msra.mxu0 0.0
  %232 = vmatprep.subr.mxu0 0.0
  %233 = vmatpush1.msra.mxu0 0.0
  %234 = vmatprep.subr.mxu0 0.0
  %235 = vmatpush1.msra.mxu0 0.0
  %236 = vmatprep.subr.mxu0 0.0
  %237 = vmatpush1.msra.mxu0 0.0
  %238 = vmatprep.subr.mxu0 0.0
  %239 = vmatpush1.msra.mxu0 0.0
  %240 = vmatprep.subr.mxu0 0.0
  %241 = vmatpush1.msra.mxu0 0.0
  %242 = vmatprep.subr.mxu0 0.0
  %243 = vmatpush1.msra.mxu0 0.0
  %244 = vmatprep.subr.mxu0 0.0
  %245 = vmatpush1.msra.mxu0 0.0
  %246 = vmatprep.subr.mxu0 0.0
  %247 = vmatpush1.msra.mxu0 0.0
  %248 = vmatprep.subr.mxu0 0.0
  %249 = vmatpush1.msra.mxu0 0.0
  %250 = vmatprep.subr.mxu0 0.0
  %251 = vmatpush1.msra.mxu0 0.0
  %252 = vmatprep.subr.mxu0 0.0
  %253 = vmatpush1.msra.mxu0 0.0
  %254 = vmatprep.subr.mxu0 0.0
  %255 = vmatpush1.msra.mxu0 0.0
  %256 = vmatprep.subr.mxu0 0.0
  %257 = vmatpush1.msra.mxu0 0.0
  %258 = vmatprep.subr.mxu0 0.0
  %259 = vmatpush1.msra.mxu0 0.0
  %260 = vmatprep.subr.mxu0 0.0
  %261 = vmatpush1.msra.mxu0 0.0
  %262 = vmatprep.subr.mxu0 0.0
  %263 = vmatpush1.msra.mxu0 0.0
  %264 = vmatprep.subr.mxu0 0.0
  %265 = vmatpush1.msra.mxu0 0.0
  %266 = vmatprep.subr.mxu0 0.0
  %267 = vmatpush1.msra.mxu0 0.0
  %268 = vmatprep.subr.mxu0 0.0
  %269 = vmatpush1.msra.mxu0 0.0
  %270 = vmatprep.subr.mxu0 0.0
  %271 = vmatpush1.msra.mxu0 0.0
  %272 = vmatprep.subr.mxu0 0.0
  %273 = vmatpush1.msra.mxu0 0.0
  %274 = vmatprep.subr.mxu0 0.0
  %275 = vmatpush1.msra.mxu0 0.0
  %276 = vmatprep.mubr.f32.mxu0 0.0
  %277 = vmatmul.mubr.f32.gmra.mrb[0].mxu0 %v76
  %v278 = vpop.f32.mrb[0].mxu0
  %v279 = vadd.f32 %v70, %v278
  %v280 = vpop.f32.mrb[0].mxu0
  %281 = vmatprep.mubr.f32.mxu0 0.0
  %282 = vmatmul.mubr.f32.gmra.mrb[0].mxu0 %v79
  %v283 = vpop.f32.mrb[0].mxu0
  %v284 = vadd.f32 %v70, %v283
  %v285 = vpop.f32.mrb[0].mxu0
  %286 = vmatprep.mubr.f32.mxu0 0.0
  %287 = vmatmul.mubr.f32.gmra.mrb[0].mxu0 %v82
  %v288 = vpop.f32.mrb[0].mxu0
  %v289 = vadd.f32 %v70, %v288
  %v290 = vpop.f32.mrb[0].mxu0
  %291 = vmatprep.mubr.f32.mxu0 0.0
  %292 = vmatmul.mubr.f32.gmra.mrb[0].mxu0 %v85
  %v293 = vpop.f32.mrb[0].mxu0
  %v294 = vadd.f32 %v70, %v293
  %v295 = vpop.f32.mrb[0].mxu0
  %296 = vmatprep.mubr.f32.mxu0 0.0
  %297 = vmatmul.mubr.f32.gmra.mrb[0].mxu0 %v88
  %v298 = vpop.f32.mrb[0].mxu0
  %v299 = vadd.f32 %v70, %v298
  %v300 = vpop.f32.mrb[0].mxu0
  %301 = vmatprep.mubr.f32.mxu0 0.0
  %302 = vmatmul.mubr.f32.gmra.mrb[0].mxu0 %v91
  %v303 = vpop.f32.mrb[0].mxu0
  %v304 = vadd.f32 %v70, %v303
  %v305 = vpop.f32.mrb[0].mxu0
  %306 = vmatprep.mubr.f32.mxu0 0.0
  %307 = vmatmul.mubr.f32.gmra.mrb[0].mxu0 %v94
  %v308 = vpop.f32.mrb[0].mxu0
  %v309 = vadd.f32 %v70, %v308
  %v310 = vpop.f32.mrb[0].mxu0
  %311 = vmatprep.mubr.f32.mxu0 0.0
  %312 = vmatmul.mubr.f32.gmra.mrb[0].mxu0 %v97
  %v313 = vpop.f32.mrb[0].mxu0
  %v314 = vadd.f32 %v70, %v313
  %v315 = vpop.f32.mrb[0].mxu0
  %316 = vdwg.mxu0
  %317 = vst [vmem:[#allocation3] sm:$0xff] %v166
  %318 = vst [vmem:[#allocation3 + $0x8] sm:$0xff] %v168
  %319 = vst [vmem:[#allocation3 + $0x10] sm:$0xff] %v279
  %320 = vst [vmem:[#allocation3 + $0x18] sm:$0xff] %v172
  %321 = vst [vmem:[#allocation3 + $0x20] sm:$0xff] %v174
  %322 = vst [vmem:[#allocation3 + $0x28] sm:$0xff] %v284
  %323 = vst [vmem:[#allocation3 + $0x30] sm:$0xff] %v178
  %324 = vst [vmem:[#allocation3 + $0x38] sm:$0xff] %v180
  %325 = vst [vmem:[#allocation3 + $0x40] sm:$0xff] %v289
  %326 = vst [vmem:[#allocation3 + $0x48] sm:$0xff] %v184
  %327 = vst [vmem:[#allocation3 + $0x50] sm:$0xff] %v186
  %328 = vst [vmem:[#allocation3 + $0x58] sm:$0xff] %v294
  %329 = vst [vmem:[#allocation3 + $0x60] sm:$0xff] %v190
  %330 = vst [vmem:[#allocation3 + $0x68] sm:$0xff] %v192
  %331 = vst [vmem:[#allocation3 + $0x70] sm:$0xff] %v299
  %332 = vst [vmem:[#allocation3 + $0x78] sm:$0xff] %v196
  %333 = vst [vmem:[#allocation3 + $0x80] sm:$0xff] %v198
  %334 = vst [vmem:[#allocation3 + $0x88] sm:$0xff] %v304
  %335 = vst [vmem:[#allocation3 + $0x90] sm:$0xff] %v202
  %336 = vst [vmem:[#allocation3 + $0x98] sm:$0xff] %v204
  %337 = vst [vmem:[#allocation3 + $0xa0] sm:$0xff] %v309
  %338 = vst [vmem:[#allocation3 + $0xa8] sm:$0xff] %v208
  %339 = vst [vmem:[#allocation3 + $0xb0] sm:$0xff] %v210
  %340 = vst [vmem:[#allocation3 + $0xb8] sm:$0xff] %v314
  %v341 = vld [vmem:[%s3] sm:$0xff]
  %v342 = vld [vmem:[%s3 + $0x8] sm:$0xff]
  %v343 = vld [vmem:[%s3 + $0x10] sm:$0xff]
  %v344 = vld [vmem:[%s3 + $0x18] sm:$0xff]
  %v345 = vld [vmem:[%s3 + $0x20] sm:$0xff]
  %v346 = vld [vmem:[%s3 + $0x28] sm:$0xff]
  %v347 = vld [vmem:[%s3 + $0x30] sm:$0xff]
  %v348 = vld [vmem:[%s3 + $0x38] sm:$0xff]
  %v349 = vld [vmem:[%s3 + $0x40] sm:$0xff]
  %v350 = vld [vmem:[%s3 + $0x48] sm:$0xff]
  %v351 = vld [vmem:[%s3 + $0x50] sm:$0xff]
  %v352 = vld [vmem:[%s3 + $0x58] sm:$0xff]
  %v353 = vld [vmem:[%s3 + $0x60] sm:$0xff]
  %v354 = vld [vmem:[%s3 + $0x68] sm:$0xff]
  %v355 = vld [vmem:[%s3 + $0x70] sm:$0xff]
  %v356 = vld [vmem:[%s3 + $0x78] sm:$0xff]
  %v357 = vld [vmem:[%s3 + $0x80] sm:$0xff]
  %v358 = vld [vmem:[%s3 + $0x88] sm:$0xff]
  %v359 = vld [vmem:[%s3 + $0x90] sm:$0xff]
  %v360 = vld [vmem:[%s3 + $0x98] sm:$0xff]
  %v361 = vld [vmem:[%s3 + $0xa0] sm:$0xff]
  %v362 = vld [vmem:[%s3 + $0xa8] sm:$0xff]
  %v363 = vld [vmem:[%s3 + $0xb0] sm:$0xff]
  %v364 = vld [vmem:[%s3 + $0xb8] sm:$0xff]
  %v365 = vld [vmem:[%s3 + $0xc0] sm:$0xff]
  %v366 = vld [vmem:[%s3 + $0xc8] sm:$0xff]
  %v367 = vld [vmem:[%s3 + $0xd0] sm:$0xff]
  %v368 = vld [vmem:[%s3 + $0xd8] sm:$0xff]
  %v369 = vld [vmem:[%s3 + $0xe0] sm:$0xff]
  %v370 = vld [vmem:[%s3 + $0xe8] sm:$0xff]
  %v371 = vld [vmem:[%s3 + $0xf0] sm:$0xff]
  %v372 = vld [vmem:[%s3 + $0xf8] sm:$0xff]
  %v373 = vld [vmem:[%s3 + $0x100] sm:$0xff]
  %v374 = vld [vmem:[%s3 + $0x108] sm:$0xff]
  %v375 = vld [vmem:[%s3 + $0x110] sm:$0xff]
  %v376 = vld [vmem:[%s3 + $0x118] sm:$0xff]
  %v377 = vld [vmem:[%s3 + $0x120] sm:$0xff]
  %v378 = vld [vmem:[%s3 + $0x128] sm:$0xff]
  %v379 = vld [vmem:[%s3 + $0x130] sm:$0xff]
  %v380 = vld [vmem:[%s3 + $0x138] sm:$0xff]
  %v381 = vld [vmem:[%s3 + $0x140] sm:$0xff]
  %v382 = vld [vmem:[%s3 + $0x148] sm:$0xff]
  %v383 = vld [vmem:[%s3 + $0x150] sm:$0xff]
  %v384 = vld [vmem:[%s3 + $0x158] sm:$0xff]
  %v385 = vld [vmem:[%s3 + $0x160] sm:$0xff]
  %v386 = vld [vmem:[%s3 + $0x168] sm:$0xff]
  %v387 = vld [vmem:[%s3 + $0x170] sm:$0xff]
  %v388 = vld [vmem:[%s3 + $0x178] sm:$0xff]
  %v389 = vld [vmem:[%s4] sm:$0x1]
  %v390 = vld [vmem:[#allocation2] sm:$0xff]
  %s391 = smul.u32 0, 3
  %s392 = smul.addr %s391, 8
  %s393 = scalar_lea.vmem [#allocation3], %s392
  %v394 = vld [vmem:[%s393] sm:$0xff]
  %v395 = vld [vmem:[%s393 + $0x8] sm:$0xff]
  %v396 = vld [vmem:[%s393 + $0x10] sm:$0xff]
  %397 = vmatprep.subr.mxu0 %v342
  %398 = vmatpush1.msra.mxu0 %v341
  %399 = vmatprep.subr.mxu0 %v345
  %400 = vmatpush1.msra.mxu0 %v344
  %401 = vmatprep.subr.mxu0 %v348
  %402 = vmatpush1.msra.mxu0 %v347
  %403 = vmatprep.subr.mxu0 %v351
  %404 = vmatpush1.msra.mxu0 %v350
  %405 = vmatprep.subr.mxu0 %v354
  %406 = vmatpush1.msra.mxu0 %v353
  %407 = vmatprep.subr.mxu0 %v357
  %408 = vmatpush1.msra.mxu0 %v356
  %409 = vmatprep.subr.mxu0 %v360
  %410 = vmatpush1.msra.mxu0 %v359
  %411 = vmatprep.subr.mxu0 %v363
  %412 = vmatpush1.msra.mxu0 %v362
  %413 = vmatprep.subr.mxu0 %v366
  %414 = vmatpush1.msra.mxu0 %v365
  %415 = vmatprep.subr.mxu0 %v369
  %416 = vmatpush1.msra.mxu0 %v368
  %417 = vmatprep.subr.mxu0 %v372
  %418 = vmatpush1.msra.mxu0 %v371
  %419 = vmatprep.subr.mxu0 %v375
  %420 = vmatpush1.msra.mxu0 %v374
  %421 = vmatprep.subr.mxu0 %v378
  %422 = vmatpush1.msra.mxu0 %v377
  %423 = vmatprep.subr.mxu0 %v381
  %424 = vmatpush1.msra.mxu0 %v380
  %425 = vmatprep.subr.mxu0 %v384
  %426 = vmatpush1.msra.mxu0 %v383
  %427 = vmatprep.subr.mxu0 %v387
  %428 = vmatpush1.msra.mxu0 %v386
  %429 = vmatprep.subr.mxu0 0.0
  %430 = vmatpush1.msra.mxu0 0.0
  %431 = vmatprep.subr.mxu0 0.0
  %432 = vmatpush1.msra.mxu0 0.0
  %433 = vmatprep.subr.mxu0 0.0
  %434 = vmatpush1.msra.mxu0 0.0
  %435 = vmatprep.subr.mxu0 0.0
  %436 = vmatpush1.msra.mxu0 0.0
  %437 = vmatprep.subr.mxu0 0.0
  %438 = vmatpush1.msra.mxu0 0.0
  %439 = vmatprep.subr.mxu0 0.0
  %440 = vmatpush1.msra.mxu0 0.0
  %441 = vmatprep.subr.mxu0 0.0
  %442 = vmatpush1.msra.mxu0 0.0
  %443 = vmatprep.subr.mxu0 0.0
  %444 = vmatpush1.msra.mxu0 0.0
  %445 = vmatprep.subr.mxu0 0.0
  %446 = vmatpush1.msra.mxu0 0.0
  %447 = vmatprep.subr.mxu0 0.0
  %448 = vmatpush1.msra.mxu0 0.0
  %449 = vmatprep.subr.mxu0 0.0
  %450 = vmatpush1.msra.mxu0 0.0
  %451 = vmatprep.subr.mxu0 0.0
  %452 = vmatpush1.msra.mxu0 0.0
  %453 = vmatprep.subr.mxu0 0.0
  %454 = vmatpush1.msra.mxu0 0.0
  %455 = vmatprep.subr.mxu0 0.0
  %456 = vmatpush1.msra.mxu0 0.0
  %457 = vmatprep.subr.mxu0 0.0
  %458 = vmatpush1.msra.mxu0 0.0
  %459 = vmatprep.subr.mxu0 0.0
  %460 = vmatpush1.msra.mxu0 0.0
  %461 = vmatprep.mubr.f32.mxu0 0.0
  %462 = vmatmul.mubr.f32.gmra.mrb[0].mxu0 %v390
  %v463 = vpop.f32.mrb[0].mxu0
  %v464 = vadd.f32 0.0, %v463
  %v465 = vpop.f32.mrb[0].mxu0
  %v466 = vadd.f32 0.0, %v465
  %467 = vdwg.mxu0
  %468 = vmatprep.subr.mxu0 0.0
  %469 = vmatpush1.msra.mxu0 %v343
  %470 = vmatprep.subr.mxu0 0.0
  %471 = vmatpush1.msra.mxu0 %v346
  %472 = vmatprep.subr.mxu0 0.0
  %473 = vmatpush1.msra.mxu0 %v349
  %474 = vmatprep.subr.mxu0 0.0
  %475 = vmatpush1.msra.mxu0 %v352
  %476 = vmatprep.subr.mxu0 0.0
  %477 = vmatpush1.msra.mxu0 %v355
  %478 = vmatprep.subr.mxu0 0.0
  %479 = vmatpush1.msra.mxu0 %v358
  %480 = vmatprep.subr.mxu0 0.0
  %481 = vmatpush1.msra.mxu0 %v361
  %482 = vmatprep.subr.mxu0 0.0
  %483 = vmatpush1.msra.mxu0 %v364
  %484 = vmatprep.subr.mxu0 0.0
  %485 = vmatpush1.msra.mxu0 %v367
  %486 = vmatprep.subr.mxu0 0.0
  %487 = vmatpush1.msra.mxu0 %v370
  %488 = vmatprep.subr.mxu0 0.0
  %489 = vmatpush1.msra.mxu0 %v373
  %490 = vmatprep.subr.mxu0 0.0
  %491 = vmatpush1.msra.mxu0 %v376
  %492 = vmatprep.subr.mxu0 0.0
  %493 = vmatpush1.msra.mxu0 %v379
  %494 = vmatprep.subr.mxu0 0.0
  %495 = vmatpush1.msra.mxu0 %v382
  %496 = vmatprep.subr.mxu0 0.0
  %497 = vmatpush1.msra.mxu0 %v385
  %498 = vmatprep.subr.mxu0 0.0
  %499 = vmatpush1.msra.mxu0 %v388
  %500 = vmatprep.subr.mxu0 0.0
  %501 = vmatpush1.msra.mxu0 0.0
  %502 = vmatprep.subr.mxu0 0.0
  %503 = vmatpush1.msra.mxu0 0.0
  %504 = vmatprep.subr.mxu0 0.0
  %505 = vmatpush1.msra.mxu0 0.0
  %506 = vmatprep.subr.mxu0 0.0
  %507 = vmatpush1.msra.mxu0 0.0
  %508 = vmatprep.subr.mxu0 0.0
  %509 = vmatpush1.msra.mxu0 0.0
  %510 = vmatprep.subr.mxu0 0.0
  %511 = vmatpush1.msra.mxu0 0.0
  %512 = vmatprep.subr.mxu0 0.0
  %513 = vmatpush1.msra.mxu0 0.0
  %514 = vmatprep.subr.mxu0 0.0
  %515 = vmatpush1.msra.mxu0 0.0
  %516 = vmatprep.subr.mxu0 0.0
  %517 = vmatpush1.msra.mxu0 0.0
  %518 = vmatprep.subr.mxu0 0.0
  %519 = vmatpush1.msra.mxu0 0.0
  %520 = vmatprep.subr.mxu0 0.0
  %521 = vmatpush1.msra.mxu0 0.0
  %522 = vmatprep.subr.mxu0 0.0
  %523 = vmatpush1.msra.mxu0 0.0
  %524 = vmatprep.subr.mxu0 0.0
  %525 = vmatpush1.msra.mxu0 0.0
  %526 = vmatprep.subr.mxu0 0.0
  %527 = vmatpush1.msra.mxu0 0.0
  %528 = vmatprep.subr.mxu0 0.0
  %529 = vmatpush1.msra.mxu0 0.0
  %530 = vmatprep.subr.mxu0 0.0
  %531 = vmatpush1.msra.mxu0 0.0
  %532 = vmatprep.mubr.f32.mxu0 0.0
  %533 = vmatmul.mubr.f32.gmra.mrb[0].mxu0 %v390
  %v534 = vpop.f32.mrb[0].mxu0
  %v535 = vadd.f32 0.0, %v534
  %v536 = vpop.f32.mrb[0].mxu0
  %537 = vdwg.mxu0
  %v538 = vadd.f32 %v394, %v464
  %v539 = vxor.u32 %v538, 2147483648
  %v540 = vmul.f32 %v539, 1.442695
  %v541 = vpow.pop %v540
  %v542 = vadd.f32 %v541, 1.0
  %v543 = vrcp.pop %v542
  %v544 = vmul.f32 1.0, %v543
  %v545 = vadd.f32 %v395, %v466
  %v546 = vxor.u32 %v545, 2147483648
  %v547 = vmul.f32 %v546, 1.442695
  %v548 = vpow.pop %v547
  %v549 = vadd.f32 %v548, 1.0
  %v550 = vrcp.pop %v549
  %v551 = vmul.f32 1.0, %v550
  %v553 = vlaneseq
  %v554 = vshrl.u32 %v553, 7
  %v555 = vsub.s32 0, %v554
  %v556 = vrot.slane %v389, %v555
  %v558 = vadd.f32 %v535, %v556
  %v559 = vmul.f32 %v544, %v558
  %v560 = vadd.f32 %v396, %v559
  %v561 = vtanh.pop %v560
  %v562 = vsub.f32 1.0, %v551
  %v563 = vmul.f32 %v562, %v561
  %v564 = vmul.f32 %v551, %v390
  %v565 = vadd.f32 %v563, %v564
  %566 = vst [vmem:[%s5] sm:$0xff] %v565
  %s567 = smul.u32 1, 3
  %s568 = smul.addr %s567, 8
  %s569 = scalar_lea.vmem [#allocation3], %s568
  %v570 = vld [vmem:[%s569] sm:$0xff]
  %v571 = vld [vmem:[%s569 + $0x8] sm:$0xff]
  %v572 = vld [vmem:[%s569 + $0x10] sm:$0xff]
  %573 = vmatprep.subr.mxu0 %v342
  %574 = vmatpush1.msra.mxu0 %v341
  %575 = vmatprep.subr.mxu0 %v345
  %576 = vmatpush1.msra.mxu0 %v344
  %577 = vmatprep.subr.mxu0 %v348
  %578 = vmatpush1.msra.mxu0 %v347
  %579 = vmatprep.subr.mxu0 %v351
  %580 = vmatpush1.msra.mxu0 %v350
  %581 = vmatprep.subr.mxu0 %v354
  %582 = vmatpush1.msra.mxu0 %v353
  %583 = vmatprep.subr.mxu0 %v357
  %584 = vmatpush1.msra.mxu0 %v356
  %585 = vmatprep.subr.mxu0 %v360
  %586 = vmatpush1.msra.mxu0 %v359
  %587 = vmatprep.subr.mxu0 %v363
  %588 = vmatpush1.msra.mxu0 %v362
  %589 = vmatprep.subr.mxu0 %v366
  %590 = vmatpush1.msra.mxu0 %v365
  %591 = vmatprep.subr.mxu0 %v369
  %592 = vmatpush1.msra.mxu0 %v368
  %593 = vmatprep.subr.mxu0 %v372
  %594 = vmatpush1.msra.mxu0 %v371
  %595 = vmatprep.subr.mxu0 %v375
  %596 = vmatpush1.msra.mxu0 %v374
  %597 = vmatprep.subr.mxu0 %v378
  %598 = vmatpush1.msra.mxu0 %v377
  %599 = vmatprep.subr.mxu0 %v381
  %600 = vmatpush1.msra.mxu0 %v380
  %601 = vmatprep.subr.mxu0 %v384
  %602 = vmatpush1.msra.mxu0 %v383
  %603 = vmatprep.subr.mxu0 %v387
  %604 = vmatpush1.msra.mxu0 %v386
  %605 = vmatprep.subr.mxu0 0.0
  %606 = vmatpush1.msra.mxu0 0.0
  %607 = vmatprep.subr.mxu0 0.0
  %608 = vmatpush1.msra.mxu0 0.0
  %609 = vmatprep.subr.mxu0 0.0
  %610 = vmatpush1.msra.mxu0 0.0
  %611 = vmatprep.subr.mxu0 0.0
  %612 = vmatpush1.msra.mxu0 0.0
  %613 = vmatprep.subr.mxu0 0.0
  %614 = vmatpush1.msra.mxu0 0.0
  %615 = vmatprep.subr.mxu0 0.0
  %616 = vmatpush1.msra.mxu0 0.0
  %617 = vmatprep.subr.mxu0 0.0
  %618 = vmatpush1.msra.mxu0 0.0
  %619 = vmatprep.subr.mxu0 0.0
  %620 = vmatpush1.msra.mxu0 0.0
  %621 = vmatprep.subr.mxu0 0.0
  %622 = vmatpush1.msra.mxu0 0.0
  %623 = vmatprep.subr.mxu0 0.0
  %624 = vmatpush1.msra.mxu0 0.0
  %625 = vmatprep.subr.mxu0 0.0
  %626 = vmatpush1.msra.mxu0 0.0
  %627 = vmatprep.subr.mxu0 0.0
  %628 = vmatpush1.msra.mxu0 0.0
  %629 = vmatprep.subr.mxu0 0.0
  %630 = vmatpush1.msra.mxu0 0.0
  %631 = vmatprep.subr.mxu0 0.0
  %632 = vmatpush1.msra.mxu0 0.0
  %633 = vmatprep.subr.mxu0 0.0
  %634 = vmatpush1.msra.mxu0 0.0
  %635 = vmatprep.subr.mxu0 0.0
  %636 = vmatpush1.msra.mxu0 0.0
  %637 = vmatprep.mubr.f32.mxu0 0.0
  %638 = vmatmul.mubr.f32.gmra.mrb[0].mxu0 %v565
  %v639 = vpop.f32.mrb[0].mxu0
  %v640 = vadd.f32 0.0, %v639
  %v641 = vpop.f32.mrb[0].mxu0
  %v642 = vadd.f32 0.0, %v641
  %643 = vdwg.mxu0
  %644 = vmatprep.subr.mxu0 0.0
  %645 = vmatpush1.msra.mxu0 %v343
  %646 = vmatprep.subr.mxu0 0.0
  %647 = vmatpush1.msra.mxu0 %v346
  %648 = vmatprep.subr.mxu0 0.0
  %649 = vmatpush1.msra.mxu0 %v349
  %650 = vmatprep.subr.mxu0 0.0
  %651 = vmatpush1.msra.mxu0 %v352
  %652 = vmatprep.subr.mxu0 0.0
  %653 = vmatpush1.msra.mxu0 %v355
  %654 = vmatprep.subr.mxu0 0.0
  %655 = vmatpush1.msra.mxu0 %v358
  %656 = vmatprep.subr.mxu0 0.0
  %657 = vmatpush1.msra.mxu0 %v361
  %658 = vmatprep.subr.mxu0 0.0
  %659 = vmatpush1.msra.mxu0 %v364
  %660 = vmatprep.subr.mxu0 0.0
  %661 = vmatpush1.msra.mxu0 %v367
  %662 = vmatprep.subr.mxu0 0.0
  %663 = vmatpush1.msra.mxu0 %v370
  %664 = vmatprep.subr.mxu0 0.0
  %665 = vmatpush1.msra.mxu0 %v373
  %666 = vmatprep.subr.mxu0 0.0
  %667 = vmatpush1.msra.mxu0 %v376
  %668 = vmatprep.subr.mxu0 0.0
  %669 = vmatpush1.msra.mxu0 %v379
  %670 = vmatprep.subr.mxu0 0.0
  %671 = vmatpush1.msra.mxu0 %v382
  %672 = vmatprep.subr.mxu0 0.0
  %673 = vmatpush1.msra.mxu0 %v385
  %674 = vmatprep.subr.mxu0 0.0
  %675 = vmatpush1.msra.mxu0 %v388
  %676 = vmatprep.subr.mxu0 0.0
  %677 = vmatpush1.msra.mxu0 0.0
  %678 = vmatprep.subr.mxu0 0.0
  %679 = vmatpush1.msra.mxu0 0.0
  %680 = vmatprep.subr.mxu0 0.0
  %681 = vmatpush1.msra.mxu0 0.0
  %682 = vmatprep.subr.mxu0 0.0
  %683 = vmatpush1.msra.mxu0 0.0
  %684 = vmatprep.subr.mxu0 0.0
  %685 = vmatpush1.msra.mxu0 0.0
  %686 = vmatprep.subr.mxu0 0.0
  %687 = vmatpush1.msra.mxu0 0.0
  %688 = vmatprep.subr.mxu0 0.0
  %689 = vmatpush1.msra.mxu0 0.0
  %690 = vmatprep.subr.mxu0 0.0
  %691 = vmatpush1.msra.mxu0 0.0
  %692 = vmatprep.subr.mxu0 0.0
  %693 = vmatpush1.msra.mxu0 0.0
  %694 = vmatprep.subr.mxu0 0.0
  %695 = vmatpush1.msra.mxu0 0.0
  %696 = vmatprep.subr.mxu0 0.0
  %697 = vmatpush1.msra.mxu0 0.0
  %698 = vmatprep.subr.mxu0 0.0
  %699 = vmatpush1.msra.mxu0 0.0
  %700 = vmatprep.subr.mxu0 0.0
  %701 = vmatpush1.msra.mxu0 0.0
  %702 = vmatprep.subr.mxu0 0.0
  %703 = vmatpush1.msra.mxu0 0.0
  %704 = vmatprep.subr.mxu0 0.0
  %705 = vmatpush1.msra.mxu0 0.0
  %706 = vmatprep.subr.mxu0 0.0
  %707 = vmatpush1.msra.mxu0 0.0
  %708 = vmatprep.mubr.f32.mxu0 0.0
  %709 = vmatmul.mubr.f32.gmra.mrb[0].mxu0 %v565
  %v710 = vpop.f32.mrb[0].mxu0
  %v711 = vadd.f32 0.0, %v710
  %v712 = vpop.f32.mrb[0].mxu0
  %713 = vdwg.mxu0
  %v714 = vadd.f32 %v570, %v640
  %v715 = vxor.u32 %v714, 2147483648
  %v716 = vmul.f32 %v715, 1.442695
  %v717 = vpow.pop %v716
  %v718 = vadd.f32 %v717, 1.0
  %v719 = vrcp.pop %v718
  %v720 = vmul.f32 1.0, %v719
  %v721 = vadd.f32 %v571, %v642
  %v722 = vxor.u32 %v721, 2147483648
  %v723 = vmul.f32 %v722, 1.442695
  %v724 = vpow.pop %v723
  %v725 = vadd.f32 %v724, 1.0
  %v726 = vrcp.pop %v725
  %v727 = vmul.f32 1.0, %v726
  %v728 = vadd.f32 %v711, %v556
  %v729 = vmul.f32 %v720, %v728
  %v730 = vadd.f32 %v572, %v729
  %v731 = vtanh.pop %v730
  %v732 = vsub.f32 1.0, %v727
  %v733 = vmul.f32 %v732, %v731
  %v734 = vmul.f32 %v727, %v565
  %v735 = vadd.f32 %v733, %v734
  %s736 = scalar_lea.vmem %s5, 8
  %737 = vst [vmem:[%s736] sm:$0xff] %v735
  %s738 = smul.u32 2, 3
  %s739 = smul.addr %s738, 8
  %s740 = scalar_lea.vmem [#allocation3], %s739
  %v741 = vld [vmem:[%s740] sm:$0xff]
  %v742 = vld [vmem:[%s740 + $0x8] sm:$0xff]
  %v743 = vld [vmem:[%s740 + $0x10] sm:$0xff]
  %744 = vmatprep.subr.mxu0 %v342
  %745 = vmatpush1.msra.mxu0 %v341
  %746 = vmatprep.subr.mxu0 %v345
  %747 = vmatpush1.msra.mxu0 %v344
  %748 = vmatprep.subr.mxu0 %v348
  %749 = vmatpush1.msra.mxu0 %v347
  %750 = vmatprep.subr.mxu0 %v351
  %751 = vmatpush1.msra.mxu0 %v350
  %752 = vmatprep.subr.mxu0 %v354
  %753 = vmatpush1.msra.mxu0 %v353
  %754 = vmatprep.subr.mxu0 %v357
  %755 = vmatpush1.msra.mxu0 %v356
  %756 = vmatprep.subr.mxu0 %v360
  %757 = vmatpush1.msra.mxu0 %v359
  %758 = vmatprep.subr.mxu0 %v363
  %759 = vmatpush1.msra.mxu0 %v362
  %760 = vmatprep.subr.mxu0 %v366
  %761 = vmatpush1.msra.mxu0 %v365
  %762 = vmatprep.subr.mxu0 %v369
  %763 = vmatpush1.msra.mxu0 %v368
  %764 = vmatprep.subr.mxu0 %v372
  %765 = vmatpush1.msra.mxu0 %v371
  %766 = vmatprep.subr.mxu0 %v375
  %767 = vmatpush1.msra.mxu0 %v374
  %768 = vmatprep.subr.mxu0 %v378
  %769 = vmatpush1.msra.mxu0 %v377
  %770 = vmatprep.subr.mxu0 %v381
  %771 = vmatpush1.msra.mxu0 %v380
  %772 = vmatprep.subr.mxu0 %v384
  %773 = vmatpush1.msra.mxu0 %v383
  %774 = vmatprep.subr.mxu0 %v387
  %775 = vmatpush1.msra.mxu0 %v386
  %776 = vmatprep.subr.mxu0 0.0
  %777 = vmatpush1.msra.mxu0 0.0
  %778 = vmatprep.subr.mxu0 0.0
  %779 = vmatpush1.msra.mxu0 0.0
  %780 = vmatprep.subr.mxu0 0.0
  %781 = vmatpush1.msra.mxu0 0.0
  %782 = vmatprep.subr.mxu0 0.0
  %783 = vmatpush1.msra.mxu0 0.0
  %784 = vmatprep.subr.mxu0 0.0
  %785 = vmatpush1.msra.mxu0 0.0
  %786 = vmatprep.subr.mxu0 0.0
  %787 = vmatpush1.msra.mxu0 0.0
  %788 = vmatprep.subr.mxu0 0.0
  %789 = vmatpush1.msra.mxu0 0.0
  %790 = vmatprep.subr.mxu0 0.0
  %791 = vmatpush1.msra.mxu0 0.0
  %792 = vmatprep.subr.mxu0 0.0
  %793 = vmatpush1.msra.mxu0 0.0
  %794 = vmatprep.subr.mxu0 0.0
  %795 = vmatpush1.msra.mxu0 0.0
  %796 = vmatprep.subr.mxu0 0.0
  %797 = vmatpush1.msra.mxu0 0.0
  %798 = vmatprep.subr.mxu0 0.0
  %799 = vmatpush1.msra.mxu0 0.0
  %800 = vmatprep.subr.mxu0 0.0
  %801 = vmatpush1.msra.mxu0 0.0
  %802 = vmatprep.subr.mxu0 0.0
  %803 = vmatpush1.msra.mxu0 0.0
  %804 = vmatprep.subr.mxu0 0.0
  %805 = vmatpush1.msra.mxu0 0.0
  %806 = vmatprep.subr.mxu0 0.0
  %807 = vmatpush1.msra.mxu0 0.0
  %808 = vmatprep.mubr.f32.mxu0 0.0
  %809 = vmatmul.mubr.f32.gmra.mrb[0].mxu0 %v735
  %v810 = vpop.f32.mrb[0].mxu0
  %v811 = vadd.f32 0.0, %v810
  %v812 = vpop.f32.mrb[0].mxu0
  %v813 = vadd.f32 0.0, %v812
  %814 = vdwg.mxu0
  %815 = vmatprep.subr.mxu0 0.0
  %816 = vmatpush1.msra.mxu0 %v343
  %817 = vmatprep.subr.mxu0 0.0
  %818 = vmatpush1.msra.mxu0 %v346
  %819 = vmatprep.subr.mxu0 0.0
  %820 = vmatpush1.msra.mxu0 %v349
  %821 = vmatprep.subr.mxu0 0.0
  %822 = vmatpush1.msra.mxu0 %v352
  %823 = vmatprep.subr.mxu0 0.0
  %824 = vmatpush1.msra.mxu0 %v355
  %825 = vmatprep.subr.mxu0 0.0
  %826 = vmatpush1.msra.mxu0 %v358
  %827 = vmatprep.subr.mxu0 0.0
  %828 = vmatpush1.msra.mxu0 %v361
  %829 = vmatprep.subr.mxu0 0.0
  %830 = vmatpush1.msra.mxu0 %v364
  %831 = vmatprep.subr.mxu0 0.0
  %832 = vmatpush1.msra.mxu0 %v367
  %833 = vmatprep.subr.mxu0 0.0
  %834 = vmatpush1.msra.mxu0 %v370
  %835 = vmatprep.subr.mxu0 0.0
  %836 = vmatpush1.msra.mxu0 %v373
  %837 = vmatprep.subr.mxu0 0.0
  %838 = vmatpush1.msra.mxu0 %v376
  %839 = vmatprep.subr.mxu0 0.0
  %840 = vmatpush1.msra.mxu0 %v379
  %841 = vmatprep.subr.mxu0 0.0
  %842 = vmatpush1.msra.mxu0 %v382
  %843 = vmatprep.subr.mxu0 0.0
  %844 = vmatpush1.msra.mxu0 %v385
  %845 = vmatprep.subr.mxu0 0.0
  %846 = vmatpush1.msra.mxu0 %v388
  %847 = vmatprep.subr.mxu0 0.0
  %848 = vmatpush1.msra.mxu0 0.0
  %849 = vmatprep.subr.mxu0 0.0
  %850 = vmatpush1.msra.mxu0 0.0
  %851 = vmatprep.subr.mxu0 0.0
  %852 = vmatpush1.msra.mxu0 0.0
  %853 = vmatprep.subr.mxu0 0.0
  %854 = vmatpush1.msra.mxu0 0.0
  %855 = vmatprep.subr.mxu0 0.0
  %856 = vmatpush1.msra.mxu0 0.0
  %857 = vmatprep.subr.mxu0 0.0
  %858 = vmatpush1.msra.mxu0 0.0
  %859 = vmatprep.subr.mxu0 0.0
  %860 = vmatpush1.msra.mxu0 0.0
  %861 = vmatprep.subr.mxu0 0.0
  %862 = vmatpush1.msra.mxu0 0.0
  %863 = vmatprep.subr.mxu0 0.0
  %864 = vmatpush1.msra.mxu0 0.0
  %865 = vmatprep.subr.mxu0 0.0
  %866 = vmatpush1.msra.mxu0 0.0
  %867 = vmatprep.subr.mxu0 0.0
  %868 = vmatpush1.msra.mxu0 0.0
  %869 = vmatprep.subr.mxu0 0.0
  %870 = vmatpush1.msra.mxu0 0.0
  %871 = vmatprep.subr.mxu0 0.0
  %872 = vmatpush1.msra.mxu0 0.0
  %873 = vmatprep.subr.mxu0 0.0
  %874 = vmatpush1.msra.mxu0 0.0
  %875 = vmatprep.subr.mxu0 0.0
  %876 = vmatpush1.msra.mxu0 0.0
  %877 = vmatprep.subr.mxu0 0.0
  %878 = vmatpush1.msra.mxu0 0.0
  %879 = vmatprep.mubr.f32.mxu0 0.0
  %880 = vmatmul.mubr.f32.gmra.mrb[0].mxu0 %v735
  %v881 = vpop.f32.mrb[0].mxu0
  %v882 = vadd.f32 0.0, %v881
  %v883 = vpop.f32.mrb[0].mxu0
  %884 = vdwg.mxu0
  %v885 = vadd.f32 %v741, %v811
  %v886 = vxor.u32 %v885, 2147483648
  %v887 = vmul.f32 %v886, 1.442695
  %v888 = vpow.pop %v887
  %v889 = vadd.f32 %v888, 1.0
  %v890 = vrcp.pop %v889
  %v891 = vmul.f32 1.0, %v890
  %v892 = vadd.f32 %v742, %v813
  %v893 = vxor.u32 %v892, 2147483648
  %v894 = vmul.f32 %v893, 1.442695
  %v895 = vpow.pop %v894
  %v896 = vadd.f32 %v895, 1.0
  %v897 = vrcp.pop %v896
  %v898 = vmul.f32 1.0, %v897
  %v899 = vadd.f32 %v882, %v556
  %v900 = vmul.f32 %v891, %v899
  %v901 = vadd.f32 %v743, %v900
  %v902 = vtanh.pop %v901
  %v903 = vsub.f32 1.0, %v898
  %v904 = vmul.f32 %v903, %v902
  %v905 = vmul.f32 %v898, %v735
  %v906 = vadd.f32 %v904, %v905
  %s907 = scalar_lea.vmem %s5, 16
  %908 = vst [vmem:[%s907] sm:$0xff] %v906
  %s909 = smul.u32 3, 3
  %s910 = smul.addr %s909, 8
  %s911 = scalar_lea.vmem [#allocation3], %s910
  %v912 = vld [vmem:[%s911] sm:$0xff]
  %v913 = vld [vmem:[%s911 + $0x8] sm:$0xff]
  %v914 = vld [vmem:[%s911 + $0x10] sm:$0xff]
  %915 = vmatprep.subr.mxu0 %v342
  %916 = vmatpush1.msra.mxu0 %v341
  %917 = vmatprep.subr.mxu0 %v345
  %918 = vmatpush1.msra.mxu0 %v344
  %919 = vmatprep.subr.mxu0 %v348
  %920 = vmatpush1.msra.mxu0 %v347
  %921 = vmatprep.subr.mxu0 %v351
  %922 = vmatpush1.msra.mxu0 %v350
  %923 = vmatprep.subr.mxu0 %v354
  %924 = vmatpush1.msra.mxu0 %v353
  %925 = vmatprep.subr.mxu0 %v357
  %926 = vmatpush1.msra.mxu0 %v356
  %927 = vmatprep.subr.mxu0 %v360
  %928 = vmatpush1.msra.mxu0 %v359
  %929 = vmatprep.subr.mxu0 %v363
  %930 = vmatpush1.msra.mxu0 %v362
  %931 = vmatprep.subr.mxu0 %v366
  %932 = vmatpush1.msra.mxu0 %v365
  %933 = vmatprep.subr.mxu0 %v369
  %934 = vmatpush1.msra.mxu0 %v368
  %935 = vmatprep.subr.mxu0 %v372
  %936 = vmatpush1.msra.mxu0 %v371
  %937 = vmatprep.subr.mxu0 %v375
  %938 = vmatpush1.msra.mxu0 %v374
  %939 = vmatprep.subr.mxu0 %v378
  %940 = vmatpush1.msra.mxu0 %v377
  %941 = vmatprep.subr.mxu0 %v381
  %942 = vmatpush1.msra.mxu0 %v380
  %943 = vmatprep.subr.mxu0 %v384
  %944 = vmatpush1.msra.mxu0 %v383
  %945 = vmatprep.subr.mxu0 %v387
  %946 = vmatpush1.msra.mxu0 %v386
  %947 = vmatprep.subr.mxu0 0.0
  %948 = vmatpush1.msra.mxu0 0.0
  %949 = vmatprep.subr.mxu0 0.0
  %950 = vmatpush1.msra.mxu0 0.0
  %951 = vmatprep.subr.mxu0 0.0
  %952 = vmatpush1.msra.mxu0 0.0
  %953 = vmatprep.subr.mxu0 0.0
  %954 = vmatpush1.msra.mxu0 0.0
  %955 = vmatprep.subr.mxu0 0.0
  %956 = vmatpush1.msra.mxu0 0.0
  %957 = vmatprep.subr.mxu0 0.0
  %958 = vmatpush1.msra.mxu0 0.0
  %959 = vmatprep.subr.mxu0 0.0
  %960 = vmatpush1.msra.mxu0 0.0
  %961 = vmatprep.subr.mxu0 0.0
  %962 = vmatpush1.msra.mxu0 0.0
  %963 = vmatprep.subr.mxu0 0.0
  %964 = vmatpush1.msra.mxu0 0.0
  %965 = vmatprep.subr.mxu0 0.0
  %966 = vmatpush1.msra.mxu0 0.0
  %967 = vmatprep.subr.mxu0 0.0
  %968 = vmatpush1.msra.mxu0 0.0
  %969 = vmatprep.subr.mxu0 0.0
  %970 = vmatpush1.msra.mxu0 0.0
  %971 = vmatprep.subr.mxu0 0.0
  %972 = vmatpush1.msra.mxu0 0.0
  %973 = vmatprep.subr.mxu0 0.0
  %974 = vmatpush1.msra.mxu0 0.0
  %975 = vmatprep.subr.mxu0 0.0
  %976 = vmatpush1.msra.mxu0 0.0
  %977 = vmatprep.subr.mxu0 0.0
  %978 = vmatpush1.msra.mxu0 0.0
  %979 = vmatprep.mubr.f32.mxu0 0.0
  %980 = vmatmul.mubr.f32.gmra.mrb[0].mxu0 %v906
  %v981 = vpop.f32.mrb[0].mxu0
  %v982 = vadd.f32 0.0, %v981
  %v983 = vpop.f32.mrb[0].mxu0
  %v984 = vadd.f32 0.0, %v983
  %985 = vdwg.mxu0
  %986 = vmatprep.subr.mxu0 0.0
  %987 = vmatpush1.msra.mxu0 %v343
  %988 = vmatprep.subr.mxu0 0.0
  %989 = vmatpush1.msra.mxu0 %v346
  %990 = vmatprep.subr.mxu0 0.0
  %991 = vmatpush1.msra.mxu0 %v349
  %992 = vmatprep.subr.mxu0 0.0
  %993 = vmatpush1.msra.mxu0 %v352
  %994 = vmatprep.subr.mxu0 0.0
  %995 = vmatpush1.msra.mxu0 %v355
  %996 = vmatprep.subr.mxu0 0.0
  %997 = vmatpush1.msra.mxu0 %v358
  %998 = vmatprep.subr.mxu0 0.0
  %999 = vmatpush1.msra.mxu0 %v361
  %1000 = vmatprep.subr.mxu0 0.0
  %1001 = vmatpush1.msra.mxu0 %v364
  %1002 = vmatprep.subr.mxu0 0.0
  %1003 = vmatpush1.msra.mxu0 %v367
  %1004 = vmatprep.subr.mxu0 0.0
  %1005 = vmatpush1.msra.mxu0 %v370
  %1006 = vmatprep.subr.mxu0 0.0
  %1007 = vmatpush1.msra.mxu0 %v373
  %1008 = vmatprep.subr.mxu0 0.0
  %1009 = vmatpush1.msra.mxu0 %v376
  %1010 = vmatprep.subr.mxu0 0.0
  %1011 = vmatpush1.msra.mxu0 %v379
  %1012 = vmatprep.subr.mxu0 0.0
  %1013 = vmatpush1.msra.mxu0 %v382
  %1014 = vmatprep.subr.mxu0 0.0
  %1015 = vmatpush1.msra.mxu0 %v385
  %1016 = vmatprep.subr.mxu0 0.0
  %1017 = vmatpush1.msra.mxu0 %v388
  %1018 = vmatprep.subr.mxu0 0.0
  %1019 = vmatpush1.msra.mxu0 0.0
  %1020 = vmatprep.subr.mxu0 0.0
  %1021 = vmatpush1.msra.mxu0 0.0
  %1022 = vmatprep.subr.mxu0 0.0
  %1023 = vmatpush1.msra.mxu0 0.0
  %1024 = vmatprep.subr.mxu0 0.0
  %1025 = vmatpush1.msra.mxu0 0.0
  %1026 = vmatprep.subr.mxu0 0.0
  %1027 = vmatpush1.msra.mxu0 0.0
  %1028 = vmatprep.subr.mxu0 0.0
  %1029 = vmatpush1.msra.mxu0 0.0
  %1030 = vmatprep.subr.mxu0 0.0
  %1031 = vmatpush1.msra.mxu0 0.0
  %1032 = vmatprep.subr.mxu0 0.0
  %1033 = vmatpush1.msra.mxu0 0.0
  %1034 = vmatprep.subr.mxu0 0.0
  %1035 = vmatpush1.msra.mxu0 0.0
  %1036 = vmatprep.subr.mxu0 0.0
  %1037 = vmatpush1.msra.mxu0 0.0
  %1038 = vmatprep.subr.mxu0 0.0
  %1039 = vmatpush1.msra.mxu0 0.0
  %1040 = vmatprep.subr.mxu0 0.0
  %1041 = vmatpush1.msra.mxu0 0.0
  %1042 = vmatprep.subr.mxu0 0.0
  %1043 = vmatpush1.msra.mxu0 0.0
  %1044 = vmatprep.subr.mxu0 0.0
  %1045 = vmatpush1.msra.mxu0 0.0
  %1046 = vmatprep.subr.mxu0 0.0
  %1047 = vmatpush1.msra.mxu0 0.0
  %1048 = vmatprep.subr.mxu0 0.0
  %1049 = vmatpush1.msra.mxu0 0.0
  %1050 = vmatprep.mubr.f32.mxu0 0.0
  %1051 = vmatmul.mubr.f32.gmra.mrb[0].mxu0 %v906
  %v1052 = vpop.f32.mrb[0].mxu0
  %v1053 = vadd.f32 0.0, %v1052
  %v1054 = vpop.f32.mrb[0].mxu0
  %1055 = vdwg.mxu0
  %v1056 = vadd.f32 %v912, %v982
  %v1057 = vxor.u32 %v1056, 2147483648
  %v1058 = vmul.f32 %v1057, 1.442695
  %v1059 = vpow.pop %v1058
  %v1060 = vadd.f32 %v1059, 1.0
  %v1061 = vrcp.pop %v1060
  %v1062 = vmul.f32 1.0, %v1061
  %v1063 = vadd.f32 %v913, %v984
  %v1064 = vxor.u32 %v1063, 2147483648
  %v1065 = vmul.f32 %v1064, 1.442695
  %v1066 = vpow.pop %v1065
  %v1067 = vadd.f32 %v1066, 1.0
  %v1068 = vrcp.pop %v1067
  %v1069 = vmul.f32 1.0, %v1068
  %v1070 = vadd.f32 %v1053, %v556
  %v1071 = vmul.f32 %v1062, %v1070
  %v1072 = vadd.f32 %v914, %v1071
  %v1073 = vtanh.pop %v1072
  %v1074 = vsub.f32 1.0, %v1069
  %v1075 = vmul.f32 %v1074, %v1073
  %v1076 = vmul.f32 %v1069, %v906
  %v1077 = vadd.f32 %v1075, %v1076
  %s1078 = scalar_lea.vmem %s5, 24
  %1079 = vst [vmem:[%s1078] sm:$0xff] %v1077
  %s1080 = smul.u32 4, 3
  %s1081 = smul.addr %s1080, 8
  %s1082 = scalar_lea.vmem [#allocation3], %s1081
  %v1083 = vld [vmem:[%s1082] sm:$0xff]
  %v1084 = vld [vmem:[%s1082 + $0x8] sm:$0xff]
  %v1085 = vld [vmem:[%s1082 + $0x10] sm:$0xff]
  %1086 = vmatprep.subr.mxu0 %v342
  %1087 = vmatpush1.msra.mxu0 %v341
  %1088 = vmatprep.subr.mxu0 %v345
  %1089 = vmatpush1.msra.mxu0 %v344
  %1090 = vmatprep.subr.mxu0 %v348
  %1091 = vmatpush1.msra.mxu0 %v347
  %1092 = vmatprep.subr.mxu0 %v351
  %1093 = vmatpush1.msra.mxu0 %v350
  %1094 = vmatprep.subr.mxu0 %v354
  %1095 = vmatpush1.msra.mxu0 %v353
  %1096 = vmatprep.subr.mxu0 %v357
  %1097 = vmatpush1.msra.mxu0 %v356
  %1098 = vmatprep.subr.mxu0 %v360
  %1099 = vmatpush1.msra.mxu0 %v359
  %1100 = vmatprep.subr.mxu0 %v363
  %1101 = vmatpush1.msra.mxu0 %v362
  %1102 = vmatprep.subr.mxu0 %v366
  %1103 = vmatpush1.msra.mxu0 %v365
  %1104 = vmatprep.subr.mxu0 %v369
  %1105 = vmatpush1.msra.mxu0 %v368
  %1106 = vmatprep.subr.mxu0 %v372
  %1107 = vmatpush1.msra.mxu0 %v371
  %1108 = vmatprep.subr.mxu0 %v375
  %1109 = vmatpush1.msra.mxu0 %v374
  %1110 = vmatprep.subr.mxu0 %v378
  %1111 = vmatpush1.msra.mxu0 %v377
  %1112 = vmatprep.subr.mxu0 %v381
  %1113 = vmatpush1.msra.mxu0 %v380
  %1114 = vmatprep.subr.mxu0 %v384
  %1115 = vmatpush1.msra.mxu0 %v383
  %1116 = vmatprep.subr.mxu0 %v387
  %1117 = vmatpush1.msra.mxu0 %v386
  %1118 = vmatprep.subr.mxu0 0.0
  %1119 = vmatpush1.msra.mxu0 0.0
  %1120 = vmatprep.subr.mxu0 0.0
  %1121 = vmatpush1.msra.mxu0 0.0
  %1122 = vmatprep.subr.mxu0 0.0
  %1123 = vmatpush1.msra.mxu0 0.0
  %1124 = vmatprep.subr.mxu0 0.0
  %1125 = vmatpush1.msra.mxu0 0.0
  %1126 = vmatprep.subr.mxu0 0.0
  %1127 = vmatpush1.msra.mxu0 0.0
  %1128 = vmatprep.subr.mxu0 0.0
  %1129 = vmatpush1.msra.mxu0 0.0
  %1130 = vmatprep.subr.mxu0 0.0
  %1131 = vmatpush1.msra.mxu0 0.0
  %1132 = vmatprep.subr.mxu0 0.0
  %1133 = vmatpush1.msra.mxu0 0.0
  %1134 = vmatprep.subr.mxu0 0.0
  %1135 = vmatpush1.msra.mxu0 0.0
  %1136 = vmatprep.subr.mxu0 0.0
  %1137 = vmatpush1.msra.mxu0 0.0
  %1138 = vmatprep.subr.mxu0 0.0
  %1139 = vmatpush1.msra.mxu0 0.0
  %1140 = vmatprep.subr.mxu0 0.0
  %1141 = vmatpush1.msra.mxu0 0.0
  %1142 = vmatprep.subr.mxu0 0.0
  %1143 = vmatpush1.msra.mxu0 0.0
  %1144 = vmatprep.subr.mxu0 0.0
  %1145 = vmatpush1.msra.mxu0 0.0
  %1146 = vmatprep.subr.mxu0 0.0
  %1147 = vmatpush1.msra.mxu0 0.0
  %1148 = vmatprep.subr.mxu0 0.0
  %1149 = vmatpush1.msra.mxu0 0.0
  %1150 = vmatprep.mubr.f32.mxu0 0.0
  %1151 = vmatmul.mubr.f32.gmra.mrb[0].mxu0 %v1077
  %v1152 = vpop.f32.mrb[0].mxu0
  %v1153 = vadd.f32 0.0, %v1152
  %v1154 = vpop.f32.mrb[0].mxu0
  %v1155 = vadd.f32 0.0, %v1154
  %1156 = vdwg.mxu0
  %1157 = vmatprep.subr.mxu0 0.0
  %1158 = vmatpush1.msra.mxu0 %v343
  %1159 = vmatprep.subr.mxu0 0.0
  %1160 = vmatpush1.msra.mxu0 %v346
  %1161 = vmatprep.subr.mxu0 0.0
  %1162 = vmatpush1.msra.mxu0 %v349
  %1163 = vmatprep.subr.mxu0 0.0
  %1164 = vmatpush1.msra.mxu0 %v352
  %1165 = vmatprep.subr.mxu0 0.0
  %1166 = vmatpush1.msra.mxu0 %v355
  %1167 = vmatprep.subr.mxu0 0.0
  %1168 = vmatpush1.msra.mxu0 %v358
  %1169 = vmatprep.subr.mxu0 0.0
  %1170 = vmatpush1.msra.mxu0 %v361
  %1171 = vmatprep.subr.mxu0 0.0
  %1172 = vmatpush1.msra.mxu0 %v364
  %1173 = vmatprep.subr.mxu0 0.0
  %1174 = vmatpush1.msra.mxu0 %v367
  %1175 = vmatprep.subr.mxu0 0.0
  %1176 = vmatpush1.msra.mxu0 %v370
  %1177 = vmatprep.subr.mxu0 0.0
  %1178 = vmatpush1.msra.mxu0 %v373
  %1179 = vmatprep.subr.mxu0 0.0
  %1180 = vmatpush1.msra.mxu0 %v376
  %1181 = vmatprep.subr.mxu0 0.0
  %1182 = vmatpush1.msra.mxu0 %v379
  %1183 = vmatprep.subr.mxu0 0.0
  %1184 = vmatpush1.msra.mxu0 %v382
  %1185 = vmatprep.subr.mxu0 0.0
  %1186 = vmatpush1.msra.mxu0 %v385
  %1187 = vmatprep.subr.mxu0 0.0
  %1188 = vmatpush1.msra.mxu0 %v388
  %1189 = vmatprep.subr.mxu0 0.0
  %1190 = vmatpush1.msra.mxu0 0.0
  %1191 = vmatprep.subr.mxu0 0.0
  %1192 = vmatpush1.msra.mxu0 0.0
  %1193 = vmatprep.subr.mxu0 0.0
  %1194 = vmatpush1.msra.mxu0 0.0
  %1195 = vmatprep.subr.mxu0 0.0
  %1196 = vmatpush1.msra.mxu0 0.0
  %1197 = vmatprep.subr.mxu0 0.0
  %1198 = vmatpush1.msra.mxu0 0.0
  %1199 = vmatprep.subr.mxu0 0.0
  %1200 = vmatpush1.msra.mxu0 0.0
  %1201 = vmatprep.subr.mxu0 0.0
  %1202 = vmatpush1.msra.mxu0 0.0
  %1203 = vmatprep.subr.mxu0 0.0
  %1204 = vmatpush1.msra.mxu0 0.0
  %1205 = vmatprep.subr.mxu0 0.0
  %1206 = vmatpush1.msra.mxu0 0.0
  %1207 = vmatprep.subr.mxu0 0.0
  %1208 = vmatpush1.msra.mxu0 0.0
  %1209 = vmatprep.subr.mxu0 0.0
  %1210 = vmatpush1.msra.mxu0 0.0
  %1211 = vmatprep.subr.mxu0 0.0
  %1212 = vmatpush1.msra.mxu0 0.0
  %1213 = vmatprep.subr.mxu0 0.0
  %1214 = vmatpush1.msra.mxu0 0.0
  %1215 = vmatprep.subr.mxu0 0.0
  %1216 = vmatpush1.msra.mxu0 0.0
  %1217 = vmatprep.subr.mxu0 0.0
  %1218 = vmatpush1.msra.mxu0 0.0
  %1219 = vmatprep.subr.mxu0 0.0
  %1220 = vmatpush1.msra.mxu0 0.0
  %1221 = vmatprep.mubr.f32.mxu0 0.0
  %1222 = vmatmul.mubr.f32.gmra.mrb[0].mxu0 %v1077
  %v1223 = vpop.f32.mrb[0].mxu0
  %v1224 = vadd.f32 0.0, %v1223
  %v1225 = vpop.f32.mrb[0].mxu0
  %1226 = vdwg.mxu0
  %v1227 = vadd.f32 %v1083, %v1153
  %v1228 = vxor.u32 %v1227, 2147483648
  %v1229 = vmul.f32 %v1228, 1.442695
  %v1230 = vpow.pop %v1229
  %v1231 = vadd.f32 %v1230, 1.0
  %v1232 = vrcp.pop %v1231
  %v1233 = vmul.f32 1.0, %v1232
  %v1234 = vadd.f32 %v1084, %v1155
  %v1235 = vxor.u32 %v1234, 2147483648
  %v1236 = vmul.f32 %v1235, 1.442695
  %v1237 = vpow.pop %v1236
  %v1238 = vadd.f32 %v1237, 1.0
  %v1239 = vrcp.pop %v1238
  %v1240 = vmul.f32 1.0, %v1239
  %v1241 = vadd.f32 %v1224, %v556
  %v1242 = vmul.f32 %v1233, %v1241
  %v1243 = vadd.f32 %v1085, %v1242
  %v1244 = vtanh.pop %v1243
  %v1245 = vsub.f32 1.0, %v1240
  %v1246 = vmul.f32 %v1245, %v1244
  %v1247 = vmul.f32 %v1240, %v1077
  %v1248 = vadd.f32 %v1246, %v1247
  %s1249 = scalar_lea.vmem %s5, 32
  %1250 = vst [vmem:[%s1249] sm:$0xff] %v1248
  %s1251 = smul.u32 5, 3
  %s1252 = smul.addr %s1251, 8
  %s1253 = scalar_lea.vmem [#allocation3], %s1252
  %v1254 = vld [vmem:[%s1253] sm:$0xff]
  %v1255 = vld [vmem:[%s1253 + $0x8] sm:$0xff]
  %v1256 = vld [vmem:[%s1253 + $0x10] sm:$0xff]
  %1257 = vmatprep.subr.mxu0 %v342
  %1258 = vmatpush1.msra.mxu0 %v341
  %1259 = vmatprep.subr.mxu0 %v345
  %1260 = vmatpush1.msra.mxu0 %v344
  %1261 = vmatprep.subr.mxu0 %v348
  %1262 = vmatpush1.msra.mxu0 %v347
  %1263 = vmatprep.subr.mxu0 %v351
  %1264 = vmatpush1.msra.mxu0 %v350
  %1265 = vmatprep.subr.mxu0 %v354
  %1266 = vmatpush1.msra.mxu0 %v353
  %1267 = vmatprep.subr.mxu0 %v357
  %1268 = vmatpush1.msra.mxu0 %v356
  %1269 = vmatprep.subr.mxu0 %v360
  %1270 = vmatpush1.msra.mxu0 %v359
  %1271 = vmatprep.subr.mxu0 %v363
  %1272 = vmatpush1.msra.mxu0 %v362
  %1273 = vmatprep.subr.mxu0 %v366
  %1274 = vmatpush1.msra.mxu0 %v365
  %1275 = vmatprep.subr.mxu0 %v369
  %1276 = vmatpush1.msra.mxu0 %v368
  %1277 = vmatprep.subr.mxu0 %v372
  %1278 = vmatpush1.msra.mxu0 %v371
  %1279 = vmatprep.subr.mxu0 %v375
  %1280 = vmatpush1.msra.mxu0 %v374
  %1281 = vmatprep.subr.mxu0 %v378
  %1282 = vmatpush1.msra.mxu0 %v377
  %1283 = vmatprep.subr.mxu0 %v381
  %1284 = vmatpush1.msra.mxu0 %v380
  %1285 = vmatprep.subr.mxu0 %v384
  %1286 = vmatpush1.msra.mxu0 %v383
  %1287 = vmatprep.subr.mxu0 %v387
  %1288 = vmatpush1.msra.mxu0 %v386
  %1289 = vmatprep.subr.mxu0 0.0
  %1290 = vmatpush1.msra.mxu0 0.0
  %1291 = vmatprep.subr.mxu0 0.0
  %1292 = vmatpush1.msra.mxu0 0.0
  %1293 = vmatprep.subr.mxu0 0.0
  %1294 = vmatpush1.msra.mxu0 0.0
  %1295 = vmatprep.subr.mxu0 0.0
  %1296 = vmatpush1.msra.mxu0 0.0
  %1297 = vmatprep.subr.mxu0 0.0
  %1298 = vmatpush1.msra.mxu0 0.0
  %1299 = vmatprep.subr.mxu0 0.0
  %1300 = vmatpush1.msra.mxu0 0.0
  %1301 = vmatprep.subr.mxu0 0.0
  %1302 = vmatpush1.msra.mxu0 0.0
  %1303 = vmatprep.subr.mxu0 0.0
  %1304 = vmatpush1.msra.mxu0 0.0
  %1305 = vmatprep.subr.mxu0 0.0
  %1306 = vmatpush1.msra.mxu0 0.0
  %1307 = vmatprep.subr.mxu0 0.0
  %1308 = vmatpush1.msra.mxu0 0.0
  %1309 = vmatprep.subr.mxu0 0.0
  %1310 = vmatpush1.msra.mxu0 0.0
  %1311 = vmatprep.subr.mxu0 0.0
  %1312 = vmatpush1.msra.mxu0 0.0
  %1313 = vmatprep.subr.mxu0 0.0
  %1314 = vmatpush1.msra.mxu0 0.0
  %1315 = vmatprep.subr.mxu0 0.0
  %1316 = vmatpush1.msra.mxu0 0.0
  %1317 = vmatprep.subr.mxu0 0.0
  %1318 = vmatpush1.msra.mxu0 0.0
  %1319 = vmatprep.subr.mxu0 0.0
  %1320 = vmatpush1.msra.mxu0 0.0
  %1321 = vmatprep.mubr.f32.mxu0 0.0
  %1322 = vmatmul.mubr.f32.gmra.mrb[0].mxu0 %v1248
  %v1323 = vpop.f32.mrb[0].mxu0
  %v1324 = vadd.f32 0.0, %v1323
  %v1325 = vpop.f32.mrb[0].mxu0
  %v1326 = vadd.f32 0.0, %v1325
  %1327 = vdwg.mxu0
  %1328 = vmatprep.subr.mxu0 0.0
  %1329 = vmatpush1.msra.mxu0 %v343
  %1330 = vmatprep.subr.mxu0 0.0
  %1331 = vmatpush1.msra.mxu0 %v346
  %1332 = vmatprep.subr.mxu0 0.0
  %1333 = vmatpush1.msra.mxu0 %v349
  %1334 = vmatprep.subr.mxu0 0.0
  %1335 = vmatpush1.msra.mxu0 %v352
  %1336 = vmatprep.subr.mxu0 0.0
  %1337 = vmatpush1.msra.mxu0 %v355
  %1338 = vmatprep.subr.mxu0 0.0
  %1339 = vmatpush1.msra.mxu0 %v358
  %1340 = vmatprep.subr.mxu0 0.0
  %1341 = vmatpush1.msra.mxu0 %v361
  %1342 = vmatprep.subr.mxu0 0.0
  %1343 = vmatpush1.msra.mxu0 %v364
  %1344 = vmatprep.subr.mxu0 0.0
  %1345 = vmatpush1.msra.mxu0 %v367
  %1346 = vmatprep.subr.mxu0 0.0
  %1347 = vmatpush1.msra.mxu0 %v370
  %1348 = vmatprep.subr.mxu0 0.0
  %1349 = vmatpush1.msra.mxu0 %v373
  %1350 = vmatprep.subr.mxu0 0.0
  %1351 = vmatpush1.msra.mxu0 %v376
  %1352 = vmatprep.subr.mxu0 0.0
  %1353 = vmatpush1.msra.mxu0 %v379
  %1354 = vmatprep.subr.mxu0 0.0
  %1355 = vmatpush1.msra.mxu0 %v382
  %1356 = vmatprep.subr.mxu0 0.0
  %1357 = vmatpush1.msra.mxu0 %v385
  %1358 = vmatprep.subr.mxu0 0.0
  %1359 = vmatpush1.msra.mxu0 %v388
  %1360 = vmatprep.subr.mxu0 0.0
  %1361 = vmatpush1.msra.mxu0 0.0
  %1362 = vmatprep.subr.mxu0 0.0
  %1363 = vmatpush1.msra.mxu0 0.0
  %1364 = vmatprep.subr.mxu0 0.0
  %1365 = vmatpush1.msra.mxu0 0.0
  %1366 = vmatprep.subr.mxu0 0.0
  %1367 = vmatpush1.msra.mxu0 0.0
  %1368 = vmatprep.subr.mxu0 0.0
  %1369 = vmatpush1.msra.mxu0 0.0
  %1370 = vmatprep.subr.mxu0 0.0
  %1371 = vmatpush1.msra.mxu0 0.0
  %1372 = vmatprep.subr.mxu0 0.0
  %1373 = vmatpush1.msra.mxu0 0.0
  %1374 = vmatprep.subr.mxu0 0.0
  %1375 = vmatpush1.msra.mxu0 0.0
  %1376 = vmatprep.subr.mxu0 0.0
  %1377 = vmatpush1.msra.mxu0 0.0
  %1378 = vmatprep.subr.mxu0 0.0
  %1379 = vmatpush1.msra.mxu0 0.0
  %1380 = vmatprep.subr.mxu0 0.0
  %1381 = vmatpush1.msra.mxu0 0.0
  %1382 = vmatprep.subr.mxu0 0.0
  %1383 = vmatpush1.msra.mxu0 0.0
  %1384 = vmatprep.subr.mxu0 0.0
  %1385 = vmatpush1.msra.mxu0 0.0
  %1386 = vmatprep.subr.mxu0 0.0
  %1387 = vmatpush1.msra.mxu0 0.0
  %1388 = vmatprep.subr.mxu0 0.0
  %1389 = vmatpush1.msra.mxu0 0.0
  %1390 = vmatprep.subr.mxu0 0.0
  %1391 = vmatpush1.msra.mxu0 0.0
  %1392 = vmatprep.mubr.f32.mxu0 0.0
  %1393 = vmatmul.mubr.f32.gmra.mrb[0].mxu0 %v1248
  %v1394 = vpop.f32.mrb[0].mxu0
  %v1395 = vadd.f32 0.0, %v1394
  %v1396 = vpop.f32.mrb[0].mxu0
  %1397 = vdwg.mxu0
  %v1398 = vadd.f32 %v1254, %v1324
  %v1399 = vxor.u32 %v1398, 2147483648
  %v1400 = vmul.f32 %v1399, 1.442695
  %v1401 = vpow.pop %v1400
  %v1402 = vadd.f32 %v1401, 1.0
  %v1403 = vrcp.pop %v1402
  %v1404 = vmul.f32 1.0, %v1403
  %v1405 = vadd.f32 %v1255, %v1326
  %v1406 = vxor.u32 %v1405, 2147483648
  %v1407 = vmul.f32 %v1406, 1.442695
  %v1408 = vpow.pop %v1407
  %v1409 = vadd.f32 %v1408, 1.0
  %v1410 = vrcp.pop %v1409
  %v1411 = vmul.f32 1.0, %v1410
  %v1412 = vadd.f32 %v1395, %v556
  %v1413 = vmul.f32 %v1404, %v1412
  %v1414 = vadd.f32 %v1256, %v1413
  %v1415 = vtanh.pop %v1414
  %v1416 = vsub.f32 1.0, %v1411
  %v1417 = vmul.f32 %v1416, %v1415
  %v1418 = vmul.f32 %v1411, %v1248
  %v1419 = vadd.f32 %v1417, %v1418
  %s1420 = scalar_lea.vmem %s5, 40
  %1421 = vst [vmem:[%s1420] sm:$0xff] %v1419
  %s1422 = smul.u32 6, 3
  %s1423 = smul.addr %s1422, 8
  %s1424 = scalar_lea.vmem [#allocation3], %s1423
  %v1425 = vld [vmem:[%s1424] sm:$0xff]
  %v1426 = vld [vmem:[%s1424 + $0x8] sm:$0xff]
  %v1427 = vld [vmem:[%s1424 + $0x10] sm:$0xff]
  %1428 = vmatprep.subr.mxu0 %v342
  %1429 = vmatpush1.msra.mxu0 %v341
  %1430 = vmatprep.subr.mxu0 %v345
  %1431 = vmatpush1.msra.mxu0 %v344
  %1432 = vmatprep.subr.mxu0 %v348
  %1433 = vmatpush1.msra.mxu0 %v347
  %1434 = vmatprep.subr.mxu0 %v351
  %1435 = vmatpush1.msra.mxu0 %v350
  %1436 = vmatprep.subr.mxu0 %v354
  %1437 = vmatpush1.msra.mxu0 %v353
  %1438 = vmatprep.subr.mxu0 %v357
  %1439 = vmatpush1.msra.mxu0 %v356
  %1440 = vmatprep.subr.mxu0 %v360
  %1441 = vmatpush1.msra.mxu0 %v359
  %1442 = vmatprep.subr.mxu0 %v363
  %1443 = vmatpush1.msra.mxu0 %v362
  %1444 = vmatprep.subr.mxu0 %v366
  %1445 = vmatpush1.msra.mxu0 %v365
  %1446 = vmatprep.subr.mxu0 %v369
  %1447 = vmatpush1.msra.mxu0 %v368
  %1448 = vmatprep.subr.mxu0 %v372
  %1449 = vmatpush1.msra.mxu0 %v371
  %1450 = vmatprep.subr.mxu0 %v375
  %1451 = vmatpush1.msra.mxu0 %v374
  %1452 = vmatprep.subr.mxu0 %v378
  %1453 = vmatpush1.msra.mxu0 %v377
  %1454 = vmatprep.subr.mxu0 %v381
  %1455 = vmatpush1.msra.mxu0 %v380
  %1456 = vmatprep.subr.mxu0 %v384
  %1457 = vmatpush1.msra.mxu0 %v383
  %1458 = vmatprep.subr.mxu0 %v387
  %1459 = vmatpush1.msra.mxu0 %v386
  %1460 = vmatprep.subr.mxu0 0.0
  %1461 = vmatpush1.msra.mxu0 0.0
  %1462 = vmatprep.subr.mxu0 0.0
  %1463 = vmatpush1.msra.mxu0 0.0
  %1464 = vmatprep.subr.mxu0 0.0
  %1465 = vmatpush1.msra.mxu0 0.0
  %1466 = vmatprep.subr.mxu0 0.0
  %1467 = vmatpush1.msra.mxu0 0.0
  %1468 = vmatprep.subr.mxu0 0.0
  %1469 = vmatpush1.msra.mxu0 0.0
  %1470 = vmatprep.subr.mxu0 0.0
  %1471 = vmatpush1.msra.mxu0 0.0
  %1472 = vmatprep.subr.mxu0 0.0
  %1473 = vmatpush1.msra.mxu0 0.0
  %1474 = vmatprep.subr.mxu0 0.0
  %1475 = vmatpush1.msra.mxu0 0.0
  %1476 = vmatprep.subr.mxu0 0.0
  %1477 = vmatpush1.msra.mxu0 0.0
  %1478 = vmatprep.subr.mxu0 0.0
  %1479 = vmatpush1.msra.mxu0 0.0
  %1480 = vmatprep.subr.mxu0 0.0
  %1481 = vmatpush1.msra.mxu0 0.0
  %1482 = vmatprep.subr.mxu0 0.0
  %1483 = vmatpush1.msra.mxu0 0.0
  %1484 = vmatprep.subr.mxu0 0.0
  %1485 = vmatpush1.msra.mxu0 0.0
  %1486 = vmatprep.subr.mxu0 0.0
  %1487 = vmatpush1.msra.mxu0 0.0
  %1488 = vmatprep.subr.mxu0 0.0
  %1489 = vmatpush1.msra.mxu0 0.0
  %1490 = vmatprep.subr.mxu0 0.0
  %1491 = vmatpush1.msra.mxu0 0.0
  %1492 = vmatprep.mubr.f32.mxu0 0.0
  %1493 = vmatmul.mubr.f32.gmra.mrb[0].mxu0 %v1419
  %v1494 = vpop.f32.mrb[0].mxu0
  %v1495 = vadd.f32 0.0, %v1494
  %v1496 = vpop.f32.mrb[0].mxu0
  %v1497 = vadd.f32 0.0, %v1496
  %1498 = vdwg.mxu0
  %1499 = vmatprep.subr.mxu0 0.0
  %1500 = vmatpush1.msra.mxu0 %v343
  %1501 = vmatprep.subr.mxu0 0.0
  %1502 = vmatpush1.msra.mxu0 %v346
  %1503 = vmatprep.subr.mxu0 0.0
  %1504 = vmatpush1.msra.mxu0 %v349
  %1505 = vmatprep.subr.mxu0 0.0
  %1506 = vmatpush1.msra.mxu0 %v352
  %1507 = vmatprep.subr.mxu0 0.0
  %1508 = vmatpush1.msra.mxu0 %v355
  %1509 = vmatprep.subr.mxu0 0.0
  %1510 = vmatpush1.msra.mxu0 %v358
  %1511 = vmatprep.subr.mxu0 0.0
  %1512 = vmatpush1.msra.mxu0 %v361
  %1513 = vmatprep.subr.mxu0 0.0
  %1514 = vmatpush1.msra.mxu0 %v364
  %1515 = vmatprep.subr.mxu0 0.0
  %1516 = vmatpush1.msra.mxu0 %v367
  %1517 = vmatprep.subr.mxu0 0.0
  %1518 = vmatpush1.msra.mxu0 %v370
  %1519 = vmatprep.subr.mxu0 0.0
  %1520 = vmatpush1.msra.mxu0 %v373
  %1521 = vmatprep.subr.mxu0 0.0
  %1522 = vmatpush1.msra.mxu0 %v376
  %1523 = vmatprep.subr.mxu0 0.0
  %1524 = vmatpush1.msra.mxu0 %v379
  %1525 = vmatprep.subr.mxu0 0.0
  %1526 = vmatpush1.msra.mxu0 %v382
  %1527 = vmatprep.subr.mxu0 0.0
  %1528 = vmatpush1.msra.mxu0 %v385
  %1529 = vmatprep.subr.mxu0 0.0
  %1530 = vmatpush1.msra.mxu0 %v388
  %1531 = vmatprep.subr.mxu0 0.0
  %1532 = vmatpush1.msra.mxu0 0.0
  %1533 = vmatprep.subr.mxu0 0.0
  %1534 = vmatpush1.msra.mxu0 0.0
  %1535 = vmatprep.subr.mxu0 0.0
  %1536 = vmatpush1.msra.mxu0 0.0
  %1537 = vmatprep.subr.mxu0 0.0
  %1538 = vmatpush1.msra.mxu0 0.0
  %1539 = vmatprep.subr.mxu0 0.0
  %1540 = vmatpush1.msra.mxu0 0.0
  %1541 = vmatprep.subr.mxu0 0.0
  %1542 = vmatpush1.msra.mxu0 0.0
  %1543 = vmatprep.subr.mxu0 0.0
  %1544 = vmatpush1.msra.mxu0 0.0
  %1545 = vmatprep.subr.mxu0 0.0
  %1546 = vmatpush1.msra.mxu0 0.0
  %1547 = vmatprep.subr.mxu0 0.0
  %1548 = vmatpush1.msra.mxu0 0.0
  %1549 = vmatprep.subr.mxu0 0.0
  %1550 = vmatpush1.msra.mxu0 0.0
  %1551 = vmatprep.subr.mxu0 0.0
  %1552 = vmatpush1.msra.mxu0 0.0
  %1553 = vmatprep.subr.mxu0 0.0
  %1554 = vmatpush1.msra.mxu0 0.0
  %1555 = vmatprep.subr.mxu0 0.0
  %1556 = vmatpush1.msra.mxu0 0.0
  %1557 = vmatprep.subr.mxu0 0.0
  %1558 = vmatpush1.msra.mxu0 0.0
  %1559 = vmatprep.subr.mxu0 0.0
  %1560 = vmatpush1.msra.mxu0 0.0
  %1561 = vmatprep.subr.mxu0 0.0
  %1562 = vmatpush1.msra.mxu0 0.0
  %1563 = vmatprep.mubr.f32.mxu0 0.0
  %1564 = vmatmul.mubr.f32.gmra.mrb[0].mxu0 %v1419
  %v1565 = vpop.f32.mrb[0].mxu0
  %v1566 = vadd.f32 0.0, %v1565
  %v1567 = vpop.f32.mrb[0].mxu0
  %1568 = vdwg.mxu0
  %v1569 = vadd.f32 %v1425, %v1495
  %v1570 = vxor.u32 %v1569, 2147483648
  %v1571 = vmul.f32 %v1570, 1.442695
  %v1572 = vpow.pop %v1571
  %v1573 = vadd.f32 %v1572, 1.0
  %v1574 = vrcp.pop %v1573
  %v1575 = vmul.f32 1.0, %v1574
  %v1576 = vadd.f32 %v1426, %v1497
  %v1577 = vxor.u32 %v1576, 2147483648
  %v1578 = vmul.f32 %v1577, 1.442695
  %v1579 = vpow.pop %v1578
  %v1580 = vadd.f32 %v1579, 1.0
  %v1581 = vrcp.pop %v1580
  %v1582 = vmul.f32 1.0, %v1581
  %v1583 = vadd.f32 %v1566, %v556
  %v1584 = vmul.f32 %v1575, %v1583
  %v1585 = vadd.f32 %v1427, %v1584
  %v1586 = vtanh.pop %v1585
  %v1587 = vsub.f32 1.0, %v1582
  %v1588 = vmul.f32 %v1587, %v1586
  %v1589 = vmul.f32 %v1582, %v1419
  %v1590 = vadd.f32 %v1588, %v1589
  %s1591 = scalar_lea.vmem %s5, 48
  %1592 = vst [vmem:[%s1591] sm:$0xff] %v1590
  %s1593 = smul.u32 7, 3
  %s1594 = smul.addr %s1593, 8
  %s1595 = scalar_lea.vmem [#allocation3], %s1594
  %v1596 = vld [vmem:[%s1595] sm:$0xff]
  %v1597 = vld [vmem:[%s1595 + $0x8] sm:$0xff]
  %v1598 = vld [vmem:[%s1595 + $0x10] sm:$0xff]
  %1599 = vmatprep.subr.mxu0 %v342
  %1600 = vmatpush1.msra.mxu0 %v341
  %1601 = vmatprep.subr.mxu0 %v345
  %1602 = vmatpush1.msra.mxu0 %v344
  %1603 = vmatprep.subr.mxu0 %v348
  %1604 = vmatpush1.msra.mxu0 %v347
  %1605 = vmatprep.subr.mxu0 %v351
  %1606 = vmatpush1.msra.mxu0 %v350
  %1607 = vmatprep.subr.mxu0 %v354
  %1608 = vmatpush1.msra.mxu0 %v353
  %1609 = vmatprep.subr.mxu0 %v357
  %1610 = vmatpush1.msra.mxu0 %v356
  %1611 = vmatprep.subr.mxu0 %v360
  %1612 = vmatpush1.msra.mxu0 %v359
  %1613 = vmatprep.subr.mxu0 %v363
  %1614 = vmatpush1.msra.mxu0 %v362
  %1615 = vmatprep.subr.mxu0 %v366
  %1616 = vmatpush1.msra.mxu0 %v365
  %1617 = vmatprep.subr.mxu0 %v369
  %1618 = vmatpush1.msra.mxu0 %v368
  %1619 = vmatprep.subr.mxu0 %v372
  %1620 = vmatpush1.msra.mxu0 %v371
  %1621 = vmatprep.subr.mxu0 %v375
  %1622 = vmatpush1.msra.mxu0 %v374
  %1623 = vmatprep.subr.mxu0 %v378
  %1624 = vmatpush1.msra.mxu0 %v377
  %1625 = vmatprep.subr.mxu0 %v381
  %1626 = vmatpush1.msra.mxu0 %v380
  %1627 = vmatprep.subr.mxu0 %v384
  %1628 = vmatpush1.msra.mxu0 %v383
  %1629 = vmatprep.subr.mxu0 %v387
  %1630 = vmatpush1.msra.mxu0 %v386
  %1631 = vmatprep.subr.mxu0 0.0
  %1632 = vmatpush1.msra.mxu0 0.0
  %1633 = vmatprep.subr.mxu0 0.0
  %1634 = vmatpush1.msra.mxu0 0.0
  %1635 = vmatprep.subr.mxu0 0.0
  %1636 = vmatpush1.msra.mxu0 0.0
  %1637 = vmatprep.subr.mxu0 0.0
  %1638 = vmatpush1.msra.mxu0 0.0
  %1639 = vmatprep.subr.mxu0 0.0
  %1640 = vmatpush1.msra.mxu0 0.0
  %1641 = vmatprep.subr.mxu0 0.0
  %1642 = vmatpush1.msra.mxu0 0.0
  %1643 = vmatprep.subr.mxu0 0.0
  %1644 = vmatpush1.msra.mxu0 0.0
  %1645 = vmatprep.subr.mxu0 0.0
  %1646 = vmatpush1.msra.mxu0 0.0
  %1647 = vmatprep.subr.mxu0 0.0
  %1648 = vmatpush1.msra.mxu0 0.0
  %1649 = vmatprep.subr.mxu0 0.0
  %1650 = vmatpush1.msra.mxu0 0.0
  %1651 = vmatprep.subr.mxu0 0.0
  %1652 = vmatpush1.msra.mxu0 0.0
  %1653 = vmatprep.subr.mxu0 0.0
  %1654 = vmatpush1.msra.mxu0 0.0
  %1655 = vmatprep.subr.mxu0 0.0
  %1656 = vmatpush1.msra.mxu0 0.0
  %1657 = vmatprep.subr.mxu0 0.0
  %1658 = vmatpush1.msra.mxu0 0.0
  %1659 = vmatprep.subr.mxu0 0.0
  %1660 = vmatpush1.msra.mxu0 0.0
  %1661 = vmatprep.subr.mxu0 0.0
  %1662 = vmatpush1.msra.mxu0 0.0
  %1663 = vmatprep.mubr.f32.mxu0 0.0
  %1664 = vmatmul.mubr.f32.gmra.mrb[0].mxu0 %v1590
  %v1665 = vpop.f32.mrb[0].mxu0
  %v1666 = vadd.f32 0.0, %v1665
  %v1667 = vpop.f32.mrb[0].mxu0
  %v1668 = vadd.f32 0.0, %v1667
  %1669 = vdwg.mxu0
  %1670 = vmatprep.subr.mxu0 0.0
  %1671 = vmatpush1.msra.mxu0 %v343
  %1672 = vmatprep.subr.mxu0 0.0
  %1673 = vmatpush1.msra.mxu0 %v346
  %1674 = vmatprep.subr.mxu0 0.0
  %1675 = vmatpush1.msra.mxu0 %v349
  %1676 = vmatprep.subr.mxu0 0.0
  %1677 = vmatpush1.msra.mxu0 %v352
  %1678 = vmatprep.subr.mxu0 0.0
  %1679 = vmatpush1.msra.mxu0 %v355
  %1680 = vmatprep.subr.mxu0 0.0
  %1681 = vmatpush1.msra.mxu0 %v358
  %1682 = vmatprep.subr.mxu0 0.0
  %1683 = vmatpush1.msra.mxu0 %v361
  %1684 = vmatprep.subr.mxu0 0.0
  %1685 = vmatpush1.msra.mxu0 %v364
  %1686 = vmatprep.subr.mxu0 0.0
  %1687 = vmatpush1.msra.mxu0 %v367
  %1688 = vmatprep.subr.mxu0 0.0
  %1689 = vmatpush1.msra.mxu0 %v370
  %1690 = vmatprep.subr.mxu0 0.0
  %1691 = vmatpush1.msra.mxu0 %v373
  %1692 = vmatprep.subr.mxu0 0.0
  %1693 = vmatpush1.msra.mxu0 %v376
  %1694 = vmatprep.subr.mxu0 0.0
  %1695 = vmatpush1.msra.mxu0 %v379
  %1696 = vmatprep.subr.mxu0 0.0
  %1697 = vmatpush1.msra.mxu0 %v382
  %1698 = vmatprep.subr.mxu0 0.0
  %1699 = vmatpush1.msra.mxu0 %v385
  %1700 = vmatprep.subr.mxu0 0.0
  %1701 = vmatpush1.msra.mxu0 %v388
  %1702 = vmatprep.subr.mxu0 0.0
  %1703 = vmatpush1.msra.mxu0 0.0
  %1704 = vmatprep.subr.mxu0 0.0
  %1705 = vmatpush1.msra.mxu0 0.0
  %1706 = vmatprep.subr.mxu0 0.0
  %1707 = vmatpush1.msra.mxu0 0.0
  %1708 = vmatprep.subr.mxu0 0.0
  %1709 = vmatpush1.msra.mxu0 0.0
  %1710 = vmatprep.subr.mxu0 0.0
  %1711 = vmatpush1.msra.mxu0 0.0
  %1712 = vmatprep.subr.mxu0 0.0
  %1713 = vmatpush1.msra.mxu0 0.0
  %1714 = vmatprep.subr.mxu0 0.0
  %1715 = vmatpush1.msra.mxu0 0.0
  %1716 = vmatprep.subr.mxu0 0.0
  %1717 = vmatpush1.msra.mxu0 0.0
  %1718 = vmatprep.subr.mxu0 0.0
  %1719 = vmatpush1.msra.mxu0 0.0
  %1720 = vmatprep.subr.mxu0 0.0
  %1721 = vmatpush1.msra.mxu0 0.0
  %1722 = vmatprep.subr.mxu0 0.0
  %1723 = vmatpush1.msra.mxu0 0.0
  %1724 = vmatprep.subr.mxu0 0.0
  %1725 = vmatpush1.msra.mxu0 0.0
  %1726 = vmatprep.subr.mxu0 0.0
  %1727 = vmatpush1.msra.mxu0 0.0
  %1728 = vmatprep.subr.mxu0 0.0
  %1729 = vmatpush1.msra.mxu0 0.0
  %1730 = vmatprep.subr.mxu0 0.0
  %1731 = vmatpush1.msra.mxu0 0.0
  %1732 = vmatprep.subr.mxu0 0.0
  %1733 = vmatpush1.msra.mxu0 0.0
  %1734 = vmatprep.mubr.f32.mxu0 0.0
  %1735 = vmatmul.mubr.f32.gmra.mrb[0].mxu0 %v1590
  %v1736 = vpop.f32.mrb[0].mxu0
  %v1737 = vadd.f32 0.0, %v1736
  %v1738 = vpop.f32.mrb[0].mxu0
  %1739 = vdwg.mxu0
  %v1740 = vadd.f32 %v1596, %v1666
  %v1741 = vxor.u32 %v1740, 2147483648
  %v1742 = vmul.f32 %v1741, 1.442695
  %v1743 = vpow.pop %v1742
  %v1744 = vadd.f32 %v1743, 1.0
  %v1745 = vrcp.pop %v1744
  %v1746 = vmul.f32 1.0, %v1745
  %v1747 = vadd.f32 %v1597, %v1668
  %v1748 = vxor.u32 %v1747, 2147483648
  %v1749 = vmul.f32 %v1748, 1.442695
  %v1750 = vpow.pop %v1749
  %v1751 = vadd.f32 %v1750, 1.0
  %v1752 = vrcp.pop %v1751
  %v1753 = vmul.f32 1.0, %v1752
  %v1754 = vadd.f32 %v1737, %v556
  %v1755 = vmul.f32 %v1746, %v1754
  %v1756 = vadd.f32 %v1598, %v1755
  %v1757 = vtanh.pop %v1756
  %v1758 = vsub.f32 1.0, %v1753
  %v1759 = vmul.f32 %v1758, %v1757
  %v1760 = vmul.f32 %v1753, %v1590
  %v1761 = vadd.f32 %v1759, %v1760
  %s1762 = scalar_lea.vmem %s5, 56
  %1763 = vst [vmem:[%s1762] sm:$0xff] %v1761
  %1764 = vst [vmem:[#allocation2] sm:$0xff] %v1761
  // Predicated region
  $region26: #{higru_forward.1} parent=0 // pred_check
    _
  $region27: #{higru_forward.1} parent=0 // pred_check_branch
    %1766 = sbr.rel (0) target = $region29
  $region28: #{higru_forward.1} parent=0 // pred_region
    _
  $region29: #{higru_forward.1} parent=0 // pred_fallthru
    _
  // Predicated region
  $region30: #{higru_forward.1} parent=0 // pred_check
    _
  $region31: #{higru_forward.1} parent=0 // pred_check_branch
    %1768 = sbr.rel (0) target = $region33
  $region32: #{higru_forward.1} parent=0 // pred_region
    _
  $region33: #{higru_forward.1} parent=0 // pred_fallthru
    _

</llo_original>
